<compile_context>
chip_gen: v7x
topology: tpu7x:2x2x1
jax: 0.10.0
libtpu: 0.0.40
codegen_flags: <defaults>
</compile_context>

<pallas_src>
import math
from functools import partial

import jax
import jax.numpy as jnp
from jax.experimental import pallas as pl
from jax.experimental.pallas import tpu as pltpu


def _pool_kernel(pif_ref, cls_ref, keffT_ref, veff_ref, bias_ref, out_ref):
    """Single invocation: all descriptors & classes resident in VMEM.

    Shapes:
      pif_ref   : (B, n_des, D)       f32   queries for descriptors d >= 1
      cls_ref   : (B, D)              f32   query for descriptor d == 0 ('cls')
      keffT_ref : (n_des, D, n_c*T)   bf16  frozen fused keys  (Wq Wk^T / sqrt(D)) @ tok^T
      veff_ref  : (n_des, n_c*T, D)   bf16  frozen fused values tok @ (Wv Wo)
      bias_ref  : (n_des, 1, n_c*T)   f32   additive mask bias (0 valid / -1e30 masked)
      out_ref   : (n_des, B, n_c, D)  f32   L2-normalized pooled text features
    """
    n_des, B, n_c, D = out_ref.shape
    CT = keffT_ref.shape[2]
    T = CT // n_c

    for d in range(n_des):  # n_des == 3, fully unrolled at trace time
        # Query selection mirrors forward(): descriptor index 0 plays the 'cls' role.
        if d == 0:
            q = cls_ref[...]                       # (B, D)
        else:
            q = pif_ref[:, d, :]                   # (B, D)
        q16 = q.astype(jnp.bfloat16)

        # One MXU matmul per descriptor: (B, D) @ (D, n_c*T) -> (B, n_c*T), f32 accumulate.
        scores = jnp.dot(q16, keffT_ref[d], preferred_element_type=jnp.float32)
        scores = scores + bias_ref[d]              # lane-dense additive mask bias

        # Per-(class, query) softmax (f32 math; exp/reciprocal go to the EUP).
        s3 = scores.reshape(B, n_c, T)
        smax = jnp.max(s3, axis=-1, keepdims=True)
        p = jnp.exp(s3 - smax)
        denom = jnp.sum(p, axis=-1, keepdims=True)
        # approx reciprocal => rows don't sum exactly to 1; the uniform per-row scale
        # error cancels exactly under the final L2 normalization.
        attn = p * pl.reciprocal(denom, approx=True)        # (B, n_c, T)

        # Pooling as a T-step VPU FMA loop (no tiny batched MXU pushes).
        v3 = veff_ref[d].astype(jnp.float32).reshape(n_c, T, D)
        pooled = jnp.zeros((B, n_c, D), jnp.float32)
        for t in range(T):
            pooled = pooled + attn[:, :, t][:, :, None] * v3[:, t, :][None, :, :]

        # x = x / x.norm(dim=-1, keepdim=True)   (eps guards the all-zero case)
        ssq = jnp.sum(pooled * pooled, axis=-1, keepdims=True)
        out_ref[d] = pooled * jax.lax.rsqrt(ssq + 1e-12)


def prepare_pooling_constants(text_features, attn_mask, wq, wk, wv, wo):
    """ONE-TIME setup (not in the per-call hot path): bake the frozen CLIP text
    features and frozen pooling weights into fused effective key/value tables.

    Single-head attention with no nonlinearity between projections is associative:
      scores = (q Wq)(tok Wk)^T / sqrt(D) = q [ (Wq Wk^T / sqrt(D)) tok^T ] = q k_effT
      out    = (attn (tok Wv)) Wo         = attn (tok Wv Wo)               = attn v_eff
    """
    n_des, n_c, n, D = text_features.shape
    T = n + 1
    scale = 1.0 / math.sqrt(D)

    # Summary token = masked mean over valid descriptions (stand-in, see TODO above).
    mask_f = attn_mask.astype(jnp.float32)
    mdenom = jnp.maximum(jnp.sum(mask_f, axis=-1, keepdims=True), 1.0)
    summary = jnp.sum(text_features * mask_f[..., None], axis=2) / mdenom      # (n_des, n_c, D)
    tokens = jnp.concatenate([summary[:, :, None, :], text_features], axis=2)  # (n_des, n_c, T, D)
    tok = tokens.reshape(n_des, n_c * T, D)

    wqk = jnp.einsum('dij,dkj->dik', wq, wk) * scale        # Wq Wk^T / sqrt(D)  (n_des, D, D)
    wvo = jnp.einsum('dij,djk->dik', wv, wo)                # Wv Wo              (n_des, D, D)
    k_effT = jnp.einsum('dij,dtj->dit', wqk, tok).astype(jnp.bfloat16)   # (n_des, D, n_c*T)
    v_eff = jnp.einsum('dti,dij->dtj', tok, wvo).astype(jnp.bfloat16)    # (n_des, n_c*T, D)

    mask_full = jnp.concatenate(
        [jnp.ones((n_des, n_c, 1), jnp.float32), mask_f], axis=-1)       # (n_des, n_c, T)
    bias = ((mask_full - 1.0) * 1e30).reshape(n_des, 1, n_c * T)         # lane-dense
    return k_effT, v_eff, bias


@partial(jax.jit, static_argnames=("n_c",))
def text_encoder_forward(prompt_img_features, cls_img_feature,
                         k_effT, v_eff, bias, *, n_c):
    """Eval-mode TextEncoder.forward hot path.

    Returns (cls_embeddings, text_embeddings, None, None, None) with
      cls_embeddings  : (B, n_c, D)
      text_embeddings : (B, n_c, n_des - 1, D)
    Descriptor index 0 plays the role of the 'cls' descriptor.
    """
    B, n_des, D = prompt_img_features.shape
    vmem = lambda: pl.BlockSpec(memory_space=pltpu.MemorySpace.VMEM)
    out = pl.pallas_call(
        _pool_kernel,
        out_shape=jax.ShapeDtypeStruct((n_des, B, n_c, D), jnp.float32),
        in_specs=[vmem() for _ in range(5)],
        out_specs=vmem(),
    )(prompt_img_features, cls_img_feature, k_effT, v_eff, bias)

    cls_embeddings = out[0]                                   # (B, n_c, D)
    text_embeddings = jnp.transpose(out[1:], (1, 2, 0, 3))    # (B, n_c, n_des-1, D)
    # Eval mode: sampled_text_features / sampled_frozen_text_features / sampled_labels unused.
    return cls_embeddings, text_embeddings, None, None, None


def _reference_forward(prompt_img_features, cls_img_feature,
                       text_features, attn_mask, wq, wk, wv, wo):
    """Pure-JAX f32 reference of the original (unfused) pooling math."""
    B, n_des, D = prompt_img_features.shape
    _, n_c, n, _ = text_features.shape
    mask_f = attn_mask.astype(jnp.float32)
    mdenom = jnp.maximum(jnp.sum(mask_f, axis=-1, keepdims=True), 1.0)
    summary = jnp.sum(text_features * mask_f[..., None], axis=2) / mdenom
    tokens = jnp.concatenate([summary[:, :, None, :], text_features], axis=2)
    mask_full = jnp.concatenate([jnp.ones((n_des, n_c, 1), jnp.float32), mask_f], axis=-1)
    outs = []
    for d in range(n_des):
        q = cls_img_feature if d == 0 else prompt_img_features[:, d, :]
        qp = q @ wq[d]
        k = jnp.einsum('ctk,kj->ctj', tokens[d], wk[d])
        v = jnp.einsum('ctk,kj->ctj', tokens[d], wv[d])
        scores = jnp.einsum('bj,ctj->bct', qp, k) / math.sqrt(D)
        scores = scores + (mask_full[d][None] - 1.0) * 1e30
        attn = jax.nn.softmax(scores, axis=-1)
        pooled = jnp.einsum('bct,ctj->bcj', attn, v)
        o = pooled @ wo[d]
        o = o / jnp.linalg.norm(o, axis=-1, keepdims=True)
        outs.append(o)
    return jnp.stack(outs, axis=0)                            # (n_des, B, n_c, D)


if __name__ == "__main__":
    # Small, TPU-friendly shapes.
    B = 4        # image batch
    n_des = 3    # descriptors (index 0 == 'cls')
    n_c = 8      # number of classes
    n = 7        # descriptions per class  -> T = 8 tokens with the summary token
    D = 128      # feature dim

    key = jax.random.PRNGKey(0)
    k0, k1, k2, k3, k4, k5, k6 = jax.random.split(key, 7)

    prompt_img_features = jax.random.normal(k0, (B, n_des, D), jnp.float32)
    cls_img_feature = jax.random.normal(k1, (B, D), jnp.float32)
    text_features = jax.random.normal(k2, (n_des, n_c, n, D), jnp.float32)

    # Deterministic ragged validity mask (variable # of descriptions per class).
    lens = 2 + (jnp.arange(n_c)[None, :] + jnp.arange(n_des)[:, None]) % (n - 1)
    attn_mask = (jnp.arange(n)[None, None, :] < lens[:, :, None]).astype(jnp.float32)

    # Deterministic per-descriptor pooling-layer parameters.
    wscale = 1.0 / math.sqrt(D)
    wq = jax.random.normal(k3, (n_des, D, D), jnp.float32) * wscale
    wk = jax.random.normal(k4, (n_des, D, D), jnp.float32) * wscale
    wv = jax.random.normal(k5, (n_des, D, D), jnp.float32) * wscale
    wo = jax.random.normal(k6, (n_des, D, D), jnp.float32) * wscale

    # One-time frozen precompute (setup path, outside the per-call hot loop).
    k_effT, v_eff, bias = prepare_pooling_constants(
        text_features, attn_mask, wq, wk, wv, wo)

    cls_emb, txt_emb, _, _, _ = text_encoder_forward(
        prompt_img_features, cls_img_feature, k_effT, v_eff, bias, n_c=n_c)
    jax.block_until_ready((cls_emb, txt_emb))

    assert cls_emb.shape == (B, n_c, D)
    assert txt_emb.shape == (B, n_c, n_des - 1, D)

    # Outputs are L2-normalized along the feature dim.
    assert bool(jnp.allclose(jnp.linalg.norm(cls_emb, axis=-1), 1.0, atol=1e-3))
    assert bool(jnp.allclose(jnp.linalg.norm(txt_emb, axis=-1), 1.0, atol=1e-3))

    # Pure-JAX reference check (bf16 fused tables vs f32 unfused reference).
    ref = _reference_forward(prompt_img_features, cls_img_feature,
                             text_features, attn_mask, wq, wk, wv, wo)
    ref_cls = ref[0]
    ref_txt = jnp.transpose(ref[1:], (1, 2, 0, 3))
    assert float(jnp.max(jnp.abs(cls_emb - ref_cls))) < 3e-2
    assert float(jnp.max(jnp.abs(txt_emb - ref_txt))) < 3e-2

    print("KERNEL_OK")
</pallas_src>

<mosaic_0001>
module attributes {stable_mosaic.version = 11 : i64} {
  func.func @_pool_kernel(%arg0: memref<4x3x128xf32, #tpu.memory_space<vmem>>, %arg1: memref<4x128xf32, #tpu.memory_space<vmem>>, %arg2: memref<3x128x64xbf16, #tpu.memory_space<vmem>>, %arg3: memref<3x64x128xbf16, #tpu.memory_space<vmem>>, %arg4: memref<3x1x64xf32, #tpu.memory_space<vmem>>, %arg5: memref<3x4x8x128xf32, #tpu.memory_space<vmem>>) attributes {dimension_semantics = [], scalar_prefetch = 0 : i64, scratch_operands = 0 : i64, tpu.core_type = #tpu.core_type<tc>} {
    %c0 = arith.constant 0 : index
    %c0_0 = arith.constant 0 : index
    %0 = vector.load %arg1[%c0, %c0_0] : memref<4x128xf32, #tpu.memory_space<vmem>>, vector<4x128xf32>
    %1 = arith.truncf %0 : vector<4x128xf32> to vector<4x128xbf16>
    %c0_1 = arith.constant 0 : index
    %c0_2 = arith.constant 0 : index
    %c0_3 = arith.constant 0 : index
    %2 = vector.load %arg2[%c0_1, %c0_2, %c0_3] : memref<3x128x64xbf16, #tpu.memory_space<vmem>>, vector<1x128x64xbf16>
    %3 = vector.shape_cast %2 : vector<1x128x64xbf16> to vector<128x64xbf16>
    %cst = arith.constant dense<0.000000e+00> : vector<4x64xf32>
    %4 = tpu.matmul %1, %3, %cst {dimension_numbers = #tpu.dot_dimension_numbers<[1], [0], [0], [1], [0, 0, 1, 1], [], []>} : vector<4x128xbf16>, vector<128x64xbf16>, vector<4x64xf32> -> vector<4x64xf32>
    %c0_4 = arith.constant 0 : index
    %c0_5 = arith.constant 0 : index
    %c0_6 = arith.constant 0 : index
    %5 = vector.load %arg4[%c0_4, %c0_5, %c0_6] : memref<3x1x64xf32, #tpu.memory_space<vmem>>, vector<1x1x64xf32>
    %6 = vector.shape_cast %5 : vector<1x1x64xf32> to vector<1x64xf32>
    %7 = vector.broadcast %6 : vector<1x64xf32> to vector<4x64xf32>
    %8 = arith.addf %4, %7 : vector<4x64xf32>
    %9 = vector.shape_cast %8 : vector<4x64xf32> to vector<4x8x8xf32>
    %cst_7 = arith.constant dense<0xFF800000> : vector<4x8xf32>
    %10 = vector.multi_reduction <maximumf>, %9, %cst_7 [2] : vector<4x8x8xf32> to vector<4x8xf32>
    %11 = vector.shape_cast %10 : vector<4x8xf32> to vector<4x8x1xf32>
    %12 = vector.broadcast %11 : vector<4x8x1xf32> to vector<4x8x8xf32>
    %13 = arith.subf %9, %12 : vector<4x8x8xf32>
    %14 = math.exp %13 : vector<4x8x8xf32>
    %cst_8 = arith.constant dense<0.000000e+00> : vector<4x8xf32>
    %15 = vector.multi_reduction <add>, %14, %cst_8 [2] : vector<4x8x8xf32> to vector<4x8xf32>
    %16 = vector.shape_cast %15 : vector<4x8xf32> to vector<4x8x1xf32>
    %17 = tpu.reciprocal %16 {approx = true} : vector<4x8x1xf32> -> vector<4x8x1xf32>
    %18 = vector.broadcast %17 : vector<4x8x1xf32> to vector<4x8x8xf32>
    %19 = arith.mulf %14, %18 : vector<4x8x8xf32>
    %c0_9 = arith.constant 0 : index
    %c0_10 = arith.constant 0 : index
    %c0_11 = arith.constant 0 : index
    %20 = vector.load %arg3[%c0_9, %c0_10, %c0_11] : memref<3x64x128xbf16, #tpu.memory_space<vmem>>, vector<1x64x128xbf16>
    %21 = vector.shape_cast %20 : vector<1x64x128xbf16> to vector<64x128xbf16>
    %22 = arith.extf %21 : vector<64x128xbf16> to vector<64x128xf32>
    %23 = vector.shape_cast %22 : vector<64x128xf32> to vector<8x8x128xf32>
    %cst_12 = arith.constant 0.000000e+00 : f32
    %24 = vector.broadcast %cst_12 : f32 to vector<4x8x128xf32>
    %25 = vector.extract_strided_slice %19 {offsets = [0, 0, 0], sizes = [4, 8, 1], strides = [1, 1, 1]} : vector<4x8x8xf32> to vector<4x8x1xf32>
    %26 = vector.shape_cast %25 : vector<4x8x1xf32> to vector<4x8xf32>
    %27 = vector.shape_cast %26 : vector<4x8xf32> to vector<4x8x1xf32>
    %28 = vector.extract_strided_slice %23 {offsets = [0, 0, 0], sizes = [8, 1, 128], strides = [1, 1, 1]} : vector<8x8x128xf32> to vector<8x1x128xf32>
    %29 = vector.shape_cast %28 : vector<8x1x128xf32> to vector<8x128xf32>
    %30 = vector.shape_cast %29 : vector<8x128xf32> to vector<1x8x128xf32>
    %31 = vector.broadcast %27 : vector<4x8x1xf32> to vector<4x8x128xf32>
    %32 = vector.broadcast %30 : vector<1x8x128xf32> to vector<4x8x128xf32>
    %33 = arith.mulf %31, %32 : vector<4x8x128xf32>
    %34 = arith.addf %24, %33 : vector<4x8x128xf32>
    %35 = vector.extract_strided_slice %19 {offsets = [0, 0, 1], sizes = [4, 8, 1], strides = [1, 1, 1]} : vector<4x8x8xf32> to vector<4x8x1xf32>
    %36 = vector.shape_cast %35 : vector<4x8x1xf32> to vector<4x8xf32>
    %37 = vector.shape_cast %36 : vector<4x8xf32> to vector<4x8x1xf32>
    %38 = vector.extract_strided_slice %23 {offsets = [0, 1, 0], sizes = [8, 1, 128], strides = [1, 1, 1]} : vector<8x8x128xf32> to vector<8x1x128xf32>
    %39 = vector.shape_cast %38 : vector<8x1x128xf32> to vector<8x128xf32>
    %40 = vector.shape_cast %39 : vector<8x128xf32> to vector<1x8x128xf32>
    %41 = vector.broadcast %37 : vector<4x8x1xf32> to vector<4x8x128xf32>
    %42 = vector.broadcast %40 : vector<1x8x128xf32> to vector<4x8x128xf32>
    %43 = arith.mulf %41, %42 : vector<4x8x128xf32>
    %44 = arith.addf %34, %43 : vector<4x8x128xf32>
    %45 = vector.extract_strided_slice %19 {offsets = [0, 0, 2], sizes = [4, 8, 1], strides = [1, 1, 1]} : vector<4x8x8xf32> to vector<4x8x1xf32>
    %46 = vector.shape_cast %45 : vector<4x8x1xf32> to vector<4x8xf32>
    %47 = vector.shape_cast %46 : vector<4x8xf32> to vector<4x8x1xf32>
    %48 = vector.extract_strided_slice %23 {offsets = [0, 2, 0], sizes = [8, 1, 128], strides = [1, 1, 1]} : vector<8x8x128xf32> to vector<8x1x128xf32>
    %49 = vector.shape_cast %48 : vector<8x1x128xf32> to vector<8x128xf32>
    %50 = vector.shape_cast %49 : vector<8x128xf32> to vector<1x8x128xf32>
    %51 = vector.broadcast %47 : vector<4x8x1xf32> to vector<4x8x128xf32>
    %52 = vector.broadcast %50 : vector<1x8x128xf32> to vector<4x8x128xf32>
    %53 = arith.mulf %51, %52 : vector<4x8x128xf32>
    %54 = arith.addf %44, %53 : vector<4x8x128xf32>
    %55 = vector.extract_strided_slice %19 {offsets = [0, 0, 3], sizes = [4, 8, 1], strides = [1, 1, 1]} : vector<4x8x8xf32> to vector<4x8x1xf32>
    %56 = vector.shape_cast %55 : vector<4x8x1xf32> to vector<4x8xf32>
    %57 = vector.shape_cast %56 : vector<4x8xf32> to vector<4x8x1xf32>
    %58 = vector.extract_strided_slice %23 {offsets = [0, 3, 0], sizes = [8, 1, 128], strides = [1, 1, 1]} : vector<8x8x128xf32> to vector<8x1x128xf32>
    %59 = vector.shape_cast %58 : vector<8x1x128xf32> to vector<8x128xf32>
    %60 = vector.shape_cast %59 : vector<8x128xf32> to vector<1x8x128xf32>
    %61 = vector.broadcast %57 : vector<4x8x1xf32> to vector<4x8x128xf32>
    %62 = vector.broadcast %60 : vector<1x8x128xf32> to vector<4x8x128xf32>
    %63 = arith.mulf %61, %62 : vector<4x8x128xf32>
    %64 = arith.addf %54, %63 : vector<4x8x128xf32>
    %65 = vector.extract_strided_slice %19 {offsets = [0, 0, 4], sizes = [4, 8, 1], strides = [1, 1, 1]} : vector<4x8x8xf32> to vector<4x8x1xf32>
    %66 = vector.shape_cast %65 : vector<4x8x1xf32> to vector<4x8xf32>
    %67 = vector.shape_cast %66 : vector<4x8xf32> to vector<4x8x1xf32>
    %68 = vector.extract_strided_slice %23 {offsets = [0, 4, 0], sizes = [8, 1, 128], strides = [1, 1, 1]} : vector<8x8x128xf32> to vector<8x1x128xf32>
    %69 = vector.shape_cast %68 : vector<8x1x128xf32> to vector<8x128xf32>
    %70 = vector.shape_cast %69 : vector<8x128xf32> to vector<1x8x128xf32>
    %71 = vector.broadcast %67 : vector<4x8x1xf32> to vector<4x8x128xf32>
    %72 = vector.broadcast %70 : vector<1x8x128xf32> to vector<4x8x128xf32>
    %73 = arith.mulf %71, %72 : vector<4x8x128xf32>
    %74 = arith.addf %64, %73 : vector<4x8x128xf32>
    %75 = vector.extract_strided_slice %19 {offsets = [0, 0, 5], sizes = [4, 8, 1], strides = [1, 1, 1]} : vector<4x8x8xf32> to vector<4x8x1xf32>
    %76 = vector.shape_cast %75 : vector<4x8x1xf32> to vector<4x8xf32>
    %77 = vector.shape_cast %76 : vector<4x8xf32> to vector<4x8x1xf32>
    %78 = vector.extract_strided_slice %23 {offsets = [0, 5, 0], sizes = [8, 1, 128], strides = [1, 1, 1]} : vector<8x8x128xf32> to vector<8x1x128xf32>
    %79 = vector.shape_cast %78 : vector<8x1x128xf32> to vector<8x128xf32>
    %80 = vector.shape_cast %79 : vector<8x128xf32> to vector<1x8x128xf32>
    %81 = vector.broadcast %77 : vector<4x8x1xf32> to vector<4x8x128xf32>
    %82 = vector.broadcast %80 : vector<1x8x128xf32> to vector<4x8x128xf32>
    %83 = arith.mulf %81, %82 : vector<4x8x128xf32>
    %84 = arith.addf %74, %83 : vector<4x8x128xf32>
    %85 = vector.extract_strided_slice %19 {offsets = [0, 0, 6], sizes = [4, 8, 1], strides = [1, 1, 1]} : vector<4x8x8xf32> to vector<4x8x1xf32>
    %86 = vector.shape_cast %85 : vector<4x8x1xf32> to vector<4x8xf32>
    %87 = vector.shape_cast %86 : vector<4x8xf32> to vector<4x8x1xf32>
    %88 = vector.extract_strided_slice %23 {offsets = [0, 6, 0], sizes = [8, 1, 128], strides = [1, 1, 1]} : vector<8x8x128xf32> to vector<8x1x128xf32>
    %89 = vector.shape_cast %88 : vector<8x1x128xf32> to vector<8x128xf32>
    %90 = vector.shape_cast %89 : vector<8x128xf32> to vector<1x8x128xf32>
    %91 = vector.broadcast %87 : vector<4x8x1xf32> to vector<4x8x128xf32>
    %92 = vector.broadcast %90 : vector<1x8x128xf32> to vector<4x8x128xf32>
    %93 = arith.mulf %91, %92 : vector<4x8x128xf32>
    %94 = arith.addf %84, %93 : vector<4x8x128xf32>
    %95 = vector.extract_strided_slice %19 {offsets = [0, 0, 7], sizes = [4, 8, 1], strides = [1, 1, 1]} : vector<4x8x8xf32> to vector<4x8x1xf32>
    %96 = vector.shape_cast %95 : vector<4x8x1xf32> to vector<4x8xf32>
    %97 = vector.shape_cast %96 : vector<4x8xf32> to vector<4x8x1xf32>
    %98 = vector.extract_strided_slice %23 {offsets = [0, 7, 0], sizes = [8, 1, 128], strides = [1, 1, 1]} : vector<8x8x128xf32> to vector<8x1x128xf32>
    %99 = vector.shape_cast %98 : vector<8x1x128xf32> to vector<8x128xf32>
    %100 = vector.shape_cast %99 : vector<8x128xf32> to vector<1x8x128xf32>
    %101 = vector.broadcast %97 : vector<4x8x1xf32> to vector<4x8x128xf32>
    %102 = vector.broadcast %100 : vector<1x8x128xf32> to vector<4x8x128xf32>
    %103 = arith.mulf %101, %102 : vector<4x8x128xf32>
    %104 = arith.addf %94, %103 : vector<4x8x128xf32>
    %105 = arith.mulf %104, %104 : vector<4x8x128xf32>
    %cst_13 = arith.constant dense<0.000000e+00> : vector<4x8xf32>
    %106 = vector.multi_reduction <add>, %105, %cst_13 [2] : vector<4x8x128xf32> to vector<4x8xf32>
    %107 = vector.shape_cast %106 : vector<4x8xf32> to vector<4x8x1xf32>
    %cst_14 = arith.constant 9.99999996E-13 : f32
    %108 = vector.broadcast %cst_14 : f32 to vector<4x8x1xf32>
    %109 = arith.addf %107, %108 : vector<4x8x1xf32>
    %110 = math.rsqrt %109 : vector<4x8x1xf32>
    %111 = vector.broadcast %110 : vector<4x8x1xf32> to vector<4x8x128xf32>
    %112 = arith.mulf %104, %111 : vector<4x8x128xf32>
    %c0_15 = arith.constant 0 : index
    %c0_16 = arith.constant 0 : index
    %c0_17 = arith.constant 0 : index
    %c0_18 = arith.constant 0 : index
    %113 = vector.load %arg5[%c0_15, %c0_16, %c0_17, %c0_18] : memref<3x4x8x128xf32, #tpu.memory_space<vmem>>, vector<1x4x8x128xf32>
    %114 = vector.shape_cast %113 : vector<1x4x8x128xf32> to vector<4x8x128xf32>
    %115 = vector.shape_cast %112 : vector<4x8x128xf32> to vector<1x4x8x128xf32>
    tpu.vector_store %arg5[%c0_15, %c0_16, %c0_17, %c0_18], %115 {strides = array<i32>} : memref<3x4x8x128xf32, #tpu.memory_space<vmem>>, vector<1x4x8x128xf32>,
    %c0_19 = arith.constant 0 : index
    %c1 = arith.constant 1 : index
    %c0_20 = arith.constant 0 : index
    %116 = vector.load %arg0[%c0_19, %c1, %c0_20] : memref<4x3x128xf32, #tpu.memory_space<vmem>>, vector<4x1x128xf32>
    %117 = vector.shape_cast %116 : vector<4x1x128xf32> to vector<4x128xf32>
    %118 = arith.truncf %117 : vector<4x128xf32> to vector<4x128xbf16>
    %c1_21 = arith.constant 1 : index
    %c0_22 = arith.constant 0 : index
    %c0_23 = arith.constant 0 : index
    %119 = vector.load %arg2[%c1_21, %c0_22, %c0_23] : memref<3x128x64xbf16, #tpu.memory_space<vmem>>, vector<1x128x64xbf16>
    %120 = vector.shape_cast %119 : vector<1x128x64xbf16> to vector<128x64xbf16>
    %cst_24 = arith.constant dense<0.000000e+00> : vector<4x64xf32>
    %121 = tpu.matmul %118, %120, %cst_24 {dimension_numbers = #tpu.dot_dimension_numbers<[1], [0], [0], [1], [0, 0, 1, 1], [], []>} : vector<4x128xbf16>, vector<128x64xbf16>, vector<4x64xf32> -> vector<4x64xf32>
    %c1_25 = arith.constant 1 : index
    %c0_26 = arith.constant 0 : index
    %c0_27 = arith.constant 0 : index
    %122 = vector.load %arg4[%c1_25, %c0_26, %c0_27] : memref<3x1x64xf32, #tpu.memory_space<vmem>>, vector<1x1x64xf32>
    %123 = vector.shape_cast %122 : vector<1x1x64xf32> to vector<1x64xf32>
    %124 = vector.broadcast %123 : vector<1x64xf32> to vector<4x64xf32>
    %125 = arith.addf %121, %124 : vector<4x64xf32>
    %126 = vector.shape_cast %125 : vector<4x64xf32> to vector<4x8x8xf32>
    %cst_28 = arith.constant dense<0xFF800000> : vector<4x8xf32>
    %127 = vector.multi_reduction <maximumf>, %126, %cst_28 [2] : vector<4x8x8xf32> to vector<4x8xf32>
    %128 = vector.shape_cast %127 : vector<4x8xf32> to vector<4x8x1xf32>
    %129 = vector.broadcast %128 : vector<4x8x1xf32> to vector<4x8x8xf32>
    %130 = arith.subf %126, %129 : vector<4x8x8xf32>
    %131 = math.exp %130 : vector<4x8x8xf32>
    %cst_29 = arith.constant dense<0.000000e+00> : vector<4x8xf32>
    %132 = vector.multi_reduction <add>, %131, %cst_29 [2] : vector<4x8x8xf32> to vector<4x8xf32>
    %133 = vector.shape_cast %132 : vector<4x8xf32> to vector<4x8x1xf32>
    %134 = tpu.reciprocal %133 {approx = true} : vector<4x8x1xf32> -> vector<4x8x1xf32>
    %135 = vector.broadcast %134 : vector<4x8x1xf32> to vector<4x8x8xf32>
    %136 = arith.mulf %131, %135 : vector<4x8x8xf32>
    %c1_30 = arith.constant 1 : index
    %c0_31 = arith.constant 0 : index
    %c0_32 = arith.constant 0 : index
    %137 = vector.load %arg3[%c1_30, %c0_31, %c0_32] : memref<3x64x128xbf16, #tpu.memory_space<vmem>>, vector<1x64x128xbf16>
    %138 = vector.shape_cast %137 : vector<1x64x128xbf16> to vector<64x128xbf16>
    %139 = arith.extf %138 : vector<64x128xbf16> to vector<64x128xf32>
    %140 = vector.shape_cast %139 : vector<64x128xf32> to vector<8x8x128xf32>
    %cst_33 = arith.constant 0.000000e+00 : f32
    %141 = vector.broadcast %cst_33 : f32 to vector<4x8x128xf32>
    %142 = vector.extract_strided_slice %136 {offsets = [0, 0, 0], sizes = [4, 8, 1], strides = [1, 1, 1]} : vector<4x8x8xf32> to vector<4x8x1xf32>
    %143 = vector.shape_cast %142 : vector<4x8x1xf32> to vector<4x8xf32>
    %144 = vector.shape_cast %143 : vector<4x8xf32> to vector<4x8x1xf32>
    %145 = vector.extract_strided_slice %140 {offsets = [0, 0, 0], sizes = [8, 1, 128], strides = [1, 1, 1]} : vector<8x8x128xf32> to vector<8x1x128xf32>
    %146 = vector.shape_cast %145 : vector<8x1x128xf32> to vector<8x128xf32>
    %147 = vector.shape_cast %146 : vector<8x128xf32> to vector<1x8x128xf32>
    %148 = vector.broadcast %144 : vector<4x8x1xf32> to vector<4x8x128xf32>
    %149 = vector.broadcast %147 : vector<1x8x128xf32> to vector<4x8x128xf32>
    %150 = arith.mulf %148, %149 : vector<4x8x128xf32>
    %151 = arith.addf %141, %150 : vector<4x8x128xf32>
    %152 = vector.extract_strided_slice %136 {offsets = [0, 0, 1], sizes = [4, 8, 1], strides = [1, 1, 1]} : vector<4x8x8xf32> to vector<4x8x1xf32>
    %153 = vector.shape_cast %152 : vector<4x8x1xf32> to vector<4x8xf32>
    %154 = vector.shape_cast %153 : vector<4x8xf32> to vector<4x8x1xf32>
    %155 = vector.extract_strided_slice %140 {offsets = [0, 1, 0], sizes = [8, 1, 128], strides = [1, 1, 1]} : vector<8x8x128xf32> to vector<8x1x128xf32>
    %156 = vector.shape_cast %155 : vector<8x1x128xf32> to vector<8x128xf32>
    %157 = vector.shape_cast %156 : vector<8x128xf32> to vector<1x8x128xf32>
    %158 = vector.broadcast %154 : vector<4x8x1xf32> to vector<4x8x128xf32>
    %159 = vector.broadcast %157 : vector<1x8x128xf32> to vector<4x8x128xf32>
    %160 = arith.mulf %158, %159 : vector<4x8x128xf32>
    %161 = arith.addf %151, %160 : vector<4x8x128xf32>
    %162 = vector.extract_strided_slice %136 {offsets = [0, 0, 2], sizes = [4, 8, 1], strides = [1, 1, 1]} : vector<4x8x8xf32> to vector<4x8x1xf32>
    %163 = vector.shape_cast %162 : vector<4x8x1xf32> to vector<4x8xf32>
    %164 = vector.shape_cast %163 : vector<4x8xf32> to vector<4x8x1xf32>
    %165 = vector.extract_strided_slice %140 {offsets = [0, 2, 0], sizes = [8, 1, 128], strides = [1, 1, 1]} : vector<8x8x128xf32> to vector<8x1x128xf32>
    %166 = vector.shape_cast %165 : vector<8x1x128xf32> to vector<8x128xf32>
    %167 = vector.shape_cast %166 : vector<8x128xf32> to vector<1x8x128xf32>
    %168 = vector.broadcast %164 : vector<4x8x1xf32> to vector<4x8x128xf32>
    %169 = vector.broadcast %167 : vector<1x8x128xf32> to vector<4x8x128xf32>
    %170 = arith.mulf %168, %169 : vector<4x8x128xf32>
    %171 = arith.addf %161, %170 : vector<4x8x128xf32>
    %172 = vector.extract_strided_slice %136 {offsets = [0, 0, 3], sizes = [4, 8, 1], strides = [1, 1, 1]} : vector<4x8x8xf32> to vector<4x8x1xf32>
    %173 = vector.shape_cast %172 : vector<4x8x1xf32> to vector<4x8xf32>
    %174 = vector.shape_cast %173 : vector<4x8xf32> to vector<4x8x1xf32>
    %175 = vector.extract_strided_slice %140 {offsets = [0, 3, 0], sizes = [8, 1, 128], strides = [1, 1, 1]} : vector<8x8x128xf32> to vector<8x1x128xf32>
    %176 = vector.shape_cast %175 : vector<8x1x128xf32> to vector<8x128xf32>
    %177 = vector.shape_cast %176 : vector<8x128xf32> to vector<1x8x128xf32>
    %178 = vector.broadcast %174 : vector<4x8x1xf32> to vector<4x8x128xf32>
    %179 = vector.broadcast %177 : vector<1x8x128xf32> to vector<4x8x128xf32>
    %180 = arith.mulf %178, %179 : vector<4x8x128xf32>
    %181 = arith.addf %171, %180 : vector<4x8x128xf32>
    %182 = vector.extract_strided_slice %136 {offsets = [0, 0, 4], sizes = [4, 8, 1], strides = [1, 1, 1]} : vector<4x8x8xf32> to vector<4x8x1xf32>
    %183 = vector.shape_cast %182 : vector<4x8x1xf32> to vector<4x8xf32>
    %184 = vector.shape_cast %183 : vector<4x8xf32> to vector<4x8x1xf32>
    %185 = vector.extract_strided_slice %140 {offsets = [0, 4, 0], sizes = [8, 1, 128], strides = [1, 1, 1]} : vector<8x8x128xf32> to vector<8x1x128xf32>
    %186 = vector.shape_cast %185 : vector<8x1x128xf32> to vector<8x128xf32>
    %187 = vector.shape_cast %186 : vector<8x128xf32> to vector<1x8x128xf32>
    %188 = vector.broadcast %184 : vector<4x8x1xf32> to vector<4x8x128xf32>
    %189 = vector.broadcast %187 : vector<1x8x128xf32> to vector<4x8x128xf32>
    %190 = arith.mulf %188, %189 : vector<4x8x128xf32>
    %191 = arith.addf %181, %190 : vector<4x8x128xf32>
    %192 = vector.extract_strided_slice %136 {offsets = [0, 0, 5], sizes = [4, 8, 1], strides = [1, 1, 1]} : vector<4x8x8xf32> to vector<4x8x1xf32>
    %193 = vector.shape_cast %192 : vector<4x8x1xf32> to vector<4x8xf32>
    %194 = vector.shape_cast %193 : vector<4x8xf32> to vector<4x8x1xf32>
    %195 = vector.extract_strided_slice %140 {offsets = [0, 5, 0], sizes = [8, 1, 128], strides = [1, 1, 1]} : vector<8x8x128xf32> to vector<8x1x128xf32>
    %196 = vector.shape_cast %195 : vector<8x1x128xf32> to vector<8x128xf32>
    %197 = vector.shape_cast %196 : vector<8x128xf32> to vector<1x8x128xf32>
    %198 = vector.broadcast %194 : vector<4x8x1xf32> to vector<4x8x128xf32>
    %199 = vector.broadcast %197 : vector<1x8x128xf32> to vector<4x8x128xf32>
    %200 = arith.mulf %198, %199 : vector<4x8x128xf32>
    %201 = arith.addf %191, %200 : vector<4x8x128xf32>
    %202 = vector.extract_strided_slice %136 {offsets = [0, 0, 6], sizes = [4, 8, 1], strides = [1, 1, 1]} : vector<4x8x8xf32> to vector<4x8x1xf32>
    %203 = vector.shape_cast %202 : vector<4x8x1xf32> to vector<4x8xf32>
    %204 = vector.shape_cast %203 : vector<4x8xf32> to vector<4x8x1xf32>
    %205 = vector.extract_strided_slice %140 {offsets = [0, 6, 0], sizes = [8, 1, 128], strides = [1, 1, 1]} : vector<8x8x128xf32> to vector<8x1x128xf32>
    %206 = vector.shape_cast %205 : vector<8x1x128xf32> to vector<8x128xf32>
    %207 = vector.shape_cast %206 : vector<8x128xf32> to vector<1x8x128xf32>
    %208 = vector.broadcast %204 : vector<4x8x1xf32> to vector<4x8x128xf32>
    %209 = vector.broadcast %207 : vector<1x8x128xf32> to vector<4x8x128xf32>
    %210 = arith.mulf %208, %209 : vector<4x8x128xf32>
    %211 = arith.addf %201, %210 : vector<4x8x128xf32>
    %212 = vector.extract_strided_slice %136 {offsets = [0, 0, 7], sizes = [4, 8, 1], strides = [1, 1, 1]} : vector<4x8x8xf32> to vector<4x8x1xf32>
    %213 = vector.shape_cast %212 : vector<4x8x1xf32> to vector<4x8xf32>
    %214 = vector.shape_cast %213 : vector<4x8xf32> to vector<4x8x1xf32>
    %215 = vector.extract_strided_slice %140 {offsets = [0, 7, 0], sizes = [8, 1, 128], strides = [1, 1, 1]} : vector<8x8x128xf32> to vector<8x1x128xf32>
    %216 = vector.shape_cast %215 : vector<8x1x128xf32> to vector<8x128xf32>
    %217 = vector.shape_cast %216 : vector<8x128xf32> to vector<1x8x128xf32>
    %218 = vector.broadcast %214 : vector<4x8x1xf32> to vector<4x8x128xf32>
    %219 = vector.broadcast %217 : vector<1x8x128xf32> to vector<4x8x128xf32>
    %220 = arith.mulf %218, %219 : vector<4x8x128xf32>
    %221 = arith.addf %211, %220 : vector<4x8x128xf32>
    %222 = arith.mulf %221, %221 : vector<4x8x128xf32>
    %cst_34 = arith.constant dense<0.000000e+00> : vector<4x8xf32>
    %223 = vector.multi_reduction <add>, %222, %cst_34 [2] : vector<4x8x128xf32> to vector<4x8xf32>
    %224 = vector.shape_cast %223 : vector<4x8xf32> to vector<4x8x1xf32>
    %cst_35 = arith.constant 9.99999996E-13 : f32
    %225 = vector.broadcast %cst_35 : f32 to vector<4x8x1xf32>
    %226 = arith.addf %224, %225 : vector<4x8x1xf32>
    %227 = math.rsqrt %226 : vector<4x8x1xf32>
    %228 = vector.broadcast %227 : vector<4x8x1xf32> to vector<4x8x128xf32>
    %229 = arith.mulf %221, %228 : vector<4x8x128xf32>
    %c1_36 = arith.constant 1 : index
    %c0_37 = arith.constant 0 : index
    %c0_38 = arith.constant 0 : index
    %c0_39 = arith.constant 0 : index
    %230 = vector.load %arg5[%c1_36, %c0_37, %c0_38, %c0_39] : memref<3x4x8x128xf32, #tpu.memory_space<vmem>>, vector<1x4x8x128xf32>
    %231 = vector.shape_cast %230 : vector<1x4x8x128xf32> to vector<4x8x128xf32>
    %232 = vector.shape_cast %229 : vector<4x8x128xf32> to vector<1x4x8x128xf32>
    tpu.vector_store %arg5[%c1_36, %c0_37, %c0_38, %c0_39], %232 {strides = array<i32>} : memref<3x4x8x128xf32, #tpu.memory_space<vmem>>, vector<1x4x8x128xf32>,
    %c0_40 = arith.constant 0 : index
    %c2 = arith.constant 2 : index
    %c0_41 = arith.constant 0 : index
    %233 = vector.load %arg0[%c0_40, %c2, %c0_41] : memref<4x3x128xf32, #tpu.memory_space<vmem>>, vector<4x1x128xf32>
    %234 = vector.shape_cast %233 : vector<4x1x128xf32> to vector<4x128xf32>
    %235 = arith.truncf %234 : vector<4x128xf32> to vector<4x128xbf16>
    %c2_42 = arith.constant 2 : index
    %c0_43 = arith.constant 0 : index
    %c0_44 = arith.constant 0 : index
    %236 = vector.load %arg2[%c2_42, %c0_43, %c0_44] : memref<3x128x64xbf16, #tpu.memory_space<vmem>>, vector<1x128x64xbf16>
    %237 = vector.shape_cast %236 : vector<1x128x64xbf16> to vector<128x64xbf16>
    %cst_45 = arith.constant dense<0.000000e+00> : vector<4x64xf32>
    %238 = tpu.matmul %235, %237, %cst_45 {dimension_numbers = #tpu.dot_dimension_numbers<[1], [0], [0], [1], [0, 0, 1, 1], [], []>} : vector<4x128xbf16>, vector<128x64xbf16>, vector<4x64xf32> -> vector<4x64xf32>
    %c2_46 = arith.constant 2 : index
    %c0_47 = arith.constant 0 : index
    %c0_48 = arith.constant 0 : index
    %239 = vector.load %arg4[%c2_46, %c0_47, %c0_48] : memref<3x1x64xf32, #tpu.memory_space<vmem>>, vector<1x1x64xf32>
    %240 = vector.shape_cast %239 : vector<1x1x64xf32> to vector<1x64xf32>
    %241 = vector.broadcast %240 : vector<1x64xf32> to vector<4x64xf32>
    %242 = arith.addf %238, %241 : vector<4x64xf32>
    %243 = vector.shape_cast %242 : vector<4x64xf32> to vector<4x8x8xf32>
    %cst_49 = arith.constant dense<0xFF800000> : vector<4x8xf32>
    %244 = vector.multi_reduction <maximumf>, %243, %cst_49 [2] : vector<4x8x8xf32> to vector<4x8xf32>
    %245 = vector.shape_cast %244 : vector<4x8xf32> to vector<4x8x1xf32>
    %246 = vector.broadcast %245 : vector<4x8x1xf32> to vector<4x8x8xf32>
    %247 = arith.subf %243, %246 : vector<4x8x8xf32>
    %248 = math.exp %247 : vector<4x8x8xf32>
    %cst_50 = arith.constant dense<0.000000e+00> : vector<4x8xf32>
    %249 = vector.multi_reduction <add>, %248, %cst_50 [2] : vector<4x8x8xf32> to vector<4x8xf32>
    %250 = vector.shape_cast %249 : vector<4x8xf32> to vector<4x8x1xf32>
    %251 = tpu.reciprocal %250 {approx = true} : vector<4x8x1xf32> -> vector<4x8x1xf32>
    %252 = vector.broadcast %251 : vector<4x8x1xf32> to vector<4x8x8xf32>
    %253 = arith.mulf %248, %252 : vector<4x8x8xf32>
    %c2_51 = arith.constant 2 : index
    %c0_52 = arith.constant 0 : index
    %c0_53 = arith.constant 0 : index
    %254 = vector.load %arg3[%c2_51, %c0_52, %c0_53] : memref<3x64x128xbf16, #tpu.memory_space<vmem>>, vector<1x64x128xbf16>
    %255 = vector.shape_cast %254 : vector<1x64x128xbf16> to vector<64x128xbf16>
    %256 = arith.extf %255 : vector<64x128xbf16> to vector<64x128xf32>
    %257 = vector.shape_cast %256 : vector<64x128xf32> to vector<8x8x128xf32>
    %cst_54 = arith.constant 0.000000e+00 : f32
    %258 = vector.broadcast %cst_54 : f32 to vector<4x8x128xf32>
    %259 = vector.extract_strided_slice %253 {offsets = [0, 0, 0], sizes = [4, 8, 1], strides = [1, 1, 1]} : vector<4x8x8xf32> to vector<4x8x1xf32>
    %260 = vector.shape_cast %259 : vector<4x8x1xf32> to vector<4x8xf32>
    %261 = vector.shape_cast %260 : vector<4x8xf32> to vector<4x8x1xf32>
    %262 = vector.extract_strided_slice %257 {offsets = [0, 0, 0], sizes = [8, 1, 128], strides = [1, 1, 1]} : vector<8x8x128xf32> to vector<8x1x128xf32>
    %263 = vector.shape_cast %262 : vector<8x1x128xf32> to vector<8x128xf32>
    %264 = vector.shape_cast %263 : vector<8x128xf32> to vector<1x8x128xf32>
    %265 = vector.broadcast %261 : vector<4x8x1xf32> to vector<4x8x128xf32>
    %266 = vector.broadcast %264 : vector<1x8x128xf32> to vector<4x8x128xf32>
    %267 = arith.mulf %265, %266 : vector<4x8x128xf32>
    %268 = arith.addf %258, %267 : vector<4x8x128xf32>
    %269 = vector.extract_strided_slice %253 {offsets = [0, 0, 1], sizes = [4, 8, 1], strides = [1, 1, 1]} : vector<4x8x8xf32> to vector<4x8x1xf32>
    %270 = vector.shape_cast %269 : vector<4x8x1xf32> to vector<4x8xf32>
    %271 = vector.shape_cast %270 : vector<4x8xf32> to vector<4x8x1xf32>
    %272 = vector.extract_strided_slice %257 {offsets = [0, 1, 0], sizes = [8, 1, 128], strides = [1, 1, 1]} : vector<8x8x128xf32> to vector<8x1x128xf32>
    %273 = vector.shape_cast %272 : vector<8x1x128xf32> to vector<8x128xf32>
    %274 = vector.shape_cast %273 : vector<8x128xf32> to vector<1x8x128xf32>
    %275 = vector.broadcast %271 : vector<4x8x1xf32> to vector<4x8x128xf32>
    %276 = vector.broadcast %274 : vector<1x8x128xf32> to vector<4x8x128xf32>
    %277 = arith.mulf %275, %276 : vector<4x8x128xf32>
    %278 = arith.addf %268, %277 : vector<4x8x128xf32>
    %279 = vector.extract_strided_slice %253 {offsets = [0, 0, 2], sizes = [4, 8, 1], strides = [1, 1, 1]} : vector<4x8x8xf32> to vector<4x8x1xf32>
    %280 = vector.shape_cast %279 : vector<4x8x1xf32> to vector<4x8xf32>
    %281 = vector.shape_cast %280 : vector<4x8xf32> to vector<4x8x1xf32>
    %282 = vector.extract_strided_slice %257 {offsets = [0, 2, 0], sizes = [8, 1, 128], strides = [1, 1, 1]} : vector<8x8x128xf32> to vector<8x1x128xf32>
    %283 = vector.shape_cast %282 : vector<8x1x128xf32> to vector<8x128xf32>
    %284 = vector.shape_cast %283 : vector<8x128xf32> to vector<1x8x128xf32>
    %285 = vector.broadcast %281 : vector<4x8x1xf32> to vector<4x8x128xf32>
    %286 = vector.broadcast %284 : vector<1x8x128xf32> to vector<4x8x128xf32>
    %287 = arith.mulf %285, %286 : vector<4x8x128xf32>
    %288 = arith.addf %278, %287 : vector<4x8x128xf32>
    %289 = vector.extract_strided_slice %253 {offsets = [0, 0, 3], sizes = [4, 8, 1], strides = [1, 1, 1]} : vector<4x8x8xf32> to vector<4x8x1xf32>
    %290 = vector.shape_cast %289 : vector<4x8x1xf32> to vector<4x8xf32>
    %291 = vector.shape_cast %290 : vector<4x8xf32> to vector<4x8x1xf32>
    %292 = vector.extract_strided_slice %257 {offsets = [0, 3, 0], sizes = [8, 1, 128], strides = [1, 1, 1]} : vector<8x8x128xf32> to vector<8x1x128xf32>
    %293 = vector.shape_cast %292 : vector<8x1x128xf32> to vector<8x128xf32>
    %294 = vector.shape_cast %293 : vector<8x128xf32> to vector<1x8x128xf32>
    %295 = vector.broadcast %291 : vector<4x8x1xf32> to vector<4x8x128xf32>
    %296 = vector.broadcast %294 : vector<1x8x128xf32> to vector<4x8x128xf32>
    %297 = arith.mulf %295, %296 : vector<4x8x128xf32>
    %298 = arith.addf %288, %297 : vector<4x8x128xf32>
    %299 = vector.extract_strided_slice %253 {offsets = [0, 0, 4], sizes = [4, 8, 1], strides = [1, 1, 1]} : vector<4x8x8xf32> to vector<4x8x1xf32>
    %300 = vector.shape_cast %299 : vector<4x8x1xf32> to vector<4x8xf32>
    %301 = vector.shape_cast %300 : vector<4x8xf32> to vector<4x8x1xf32>
    %302 = vector.extract_strided_slice %257 {offsets = [0, 4, 0], sizes = [8, 1, 128], strides = [1, 1, 1]} : vector<8x8x128xf32> to vector<8x1x128xf32>
    %303 = vector.shape_cast %302 : vector<8x1x128xf32> to vector<8x128xf32>
    %304 = vector.shape_cast %303 : vector<8x128xf32> to vector<1x8x128xf32>
    %305 = vector.broadcast %301 : vector<4x8x1xf32> to vector<4x8x128xf32>
    %306 = vector.broadcast %304 : vector<1x8x128xf32> to vector<4x8x128xf32>
    %307 = arith.mulf %305, %306 : vector<4x8x128xf32>
    %308 = arith.addf %298, %307 : vector<4x8x128xf32>
    %309 = vector.extract_strided_slice %253 {offsets = [0, 0, 5], sizes = [4, 8, 1], strides = [1, 1, 1]} : vector<4x8x8xf32> to vector<4x8x1xf32>
    %310 = vector.shape_cast %309 : vector<4x8x1xf32> to vector<4x8xf32>
    %311 = vector.shape_cast %310 : vector<4x8xf32> to vector<4x8x1xf32>
    %312 = vector.extract_strided_slice %257 {offsets = [0, 5, 0], sizes = [8, 1, 128], strides = [1, 1, 1]} : vector<8x8x128xf32> to vector<8x1x128xf32>
    %313 = vector.shape_cast %312 : vector<8x1x128xf32> to vector<8x128xf32>
    %314 = vector.shape_cast %313 : vector<8x128xf32> to vector<1x8x128xf32>
    %315 = vector.broadcast %311 : vector<4x8x1xf32> to vector<4x8x128xf32>
    %316 = vector.broadcast %314 : vector<1x8x128xf32> to vector<4x8x128xf32>
    %317 = arith.mulf %315, %316 : vector<4x8x128xf32>
    %318 = arith.addf %308, %317 : vector<4x8x128xf32>
    %319 = vector.extract_strided_slice %253 {offsets = [0, 0, 6], sizes = [4, 8, 1], strides = [1, 1, 1]} : vector<4x8x8xf32> to vector<4x8x1xf32>
    %320 = vector.shape_cast %319 : vector<4x8x1xf32> to vector<4x8xf32>
    %321 = vector.shape_cast %320 : vector<4x8xf32> to vector<4x8x1xf32>
    %322 = vector.extract_strided_slice %257 {offsets = [0, 6, 0], sizes = [8, 1, 128], strides = [1, 1, 1]} : vector<8x8x128xf32> to vector<8x1x128xf32>
    %323 = vector.shape_cast %322 : vector<8x1x128xf32> to vector<8x128xf32>
    %324 = vector.shape_cast %323 : vector<8x128xf32> to vector<1x8x128xf32>
    %325 = vector.broadcast %321 : vector<4x8x1xf32> to vector<4x8x128xf32>
    %326 = vector.broadcast %324 : vector<1x8x128xf32> to vector<4x8x128xf32>
    %327 = arith.mulf %325, %326 : vector<4x8x128xf32>
    %328 = arith.addf %318, %327 : vector<4x8x128xf32>
    %329 = vector.extract_strided_slice %253 {offsets = [0, 0, 7], sizes = [4, 8, 1], strides = [1, 1, 1]} : vector<4x8x8xf32> to vector<4x8x1xf32>
    %330 = vector.shape_cast %329 : vector<4x8x1xf32> to vector<4x8xf32>
    %331 = vector.shape_cast %330 : vector<4x8xf32> to vector<4x8x1xf32>
    %332 = vector.extract_strided_slice %257 {offsets = [0, 7, 0], sizes = [8, 1, 128], strides = [1, 1, 1]} : vector<8x8x128xf32> to vector<8x1x128xf32>
    %333 = vector.shape_cast %332 : vector<8x1x128xf32> to vector<8x128xf32>
    %334 = vector.shape_cast %333 : vector<8x128xf32> to vector<1x8x128xf32>
    %335 = vector.broadcast %331 : vector<4x8x1xf32> to vector<4x8x128xf32>
    %336 = vector.broadcast %334 : vector<1x8x128xf32> to vector<4x8x128xf32>
    %337 = arith.mulf %335, %336 : vector<4x8x128xf32>
    %338 = arith.addf %328, %337 : vector<4x8x128xf32>
    %339 = arith.mulf %338, %338 : vector<4x8x128xf32>
    %cst_55 = arith.constant dense<0.000000e+00> : vector<4x8xf32>
    %340 = vector.multi_reduction <add>, %339, %cst_55 [2] : vector<4x8x128xf32> to vector<4x8xf32>
    %341 = vector.shape_cast %340 : vector<4x8xf32> to vector<4x8x1xf32>
    %cst_56 = arith.constant 9.99999996E-13 : f32
    %342 = vector.broadcast %cst_56 : f32 to vector<4x8x1xf32>
    %343 = arith.addf %341, %342 : vector<4x8x1xf32>
    %344 = math.rsqrt %343 : vector<4x8x1xf32>
    %345 = vector.broadcast %344 : vector<4x8x1xf32> to vector<4x8x128xf32>
    %346 = arith.mulf %338, %345 : vector<4x8x128xf32>
    %c2_57 = arith.constant 2 : index
    %c0_58 = arith.constant 0 : index
    %c0_59 = arith.constant 0 : index
    %c0_60 = arith.constant 0 : index
    %347 = vector.load %arg5[%c2_57, %c0_58, %c0_59, %c0_60] : memref<3x4x8x128xf32, #tpu.memory_space<vmem>>, vector<1x4x8x128xf32>
    %348 = vector.shape_cast %347 : vector<1x4x8x128xf32> to vector<4x8x128xf32>
    %349 = vector.shape_cast %346 : vector<4x8x128xf32> to vector<1x4x8x128xf32>
    tpu.vector_store %arg5[%c2_57, %c0_58, %c0_59, %c0_60], %349 {strides = array<i32>} : memref<3x4x8x128xf32, #tpu.memory_space<vmem>>, vector<1x4x8x128xf32>,
    return
  }
}

</mosaic_0001>

<llo_original>
// kernel: text_encoder_forward.1
$region0: #{text_encoder_forward.1}
  #allocation0 [shape = 'u32[]', space=smem, size = 0x4, offset = 0x4, fixed_abs, tag = 'smem constant byte address 0x4 - core index']
  #allocation1 [shape = 'u32[144,128]{1,0:T(1,128)}', space=vmem, size = 0x12000, scoped, tag = 'internal scratch']
  %s0 = inlined_call_operand.vmem [shape: f32[4,3,128], index: 0, kind: input, shape index: {}]
  %s1 = inlined_call_operand.vmem [shape: f32[4,128], index: 1, kind: input, shape index: {}]
  %s2 = inlined_call_operand.vmem [shape: bf16[3,128,64], index: 2, kind: input, shape index: {}]
  %s3 = inlined_call_operand.vmem [shape: bf16[3,64,128], index: 3, kind: input, shape index: {}]
  %s4 = inlined_call_operand.vmem [shape: f32[3,1,64], index: 4, kind: input, shape index: {}]
  %s5 = inlined_call_operand.vmem [shape: f32[3,4,8,128], index: 5, kind: output, shape index: {}]
  %s6 = sld [smem:[#allocation0]]
  $region30: #{text_encoder_forward.1} parent=0
    _
  %s8 = ssub.s32 1, %s6
  %s9 = scalar_select 0, %s8, %s6
  // Predicated region
  $region2: #{text_encoder_forward.1} parent=0 // pred_check
    _
  $region3: #{text_encoder_forward.1} parent=0 // pred_check_branch
    %11 = sbr.rel (0) target = $region5
  $region4: #{text_encoder_forward.1} parent=0 // pred_region
    _
  $region5: #{text_encoder_forward.1} parent=0 // pred_fallthru
    _
  // Predicated region
  $region6: #{text_encoder_forward.1} parent=0 // pred_check
    _
  $region7: #{text_encoder_forward.1} parent=0 // pred_check_branch
    %13 = sbr.rel (0) target = $region9
  $region8: #{text_encoder_forward.1} parent=0 // pred_region
    _
  $region9: #{text_encoder_forward.1} parent=0 // pred_fallthru
    _
  // Predicated region
  $region10: #{text_encoder_forward.1} parent=0 // pred_check
    _
  $region11: #{text_encoder_forward.1} parent=0 // pred_check_branch
    %15 = sbr.rel (0) target = $region13
  $region12: #{text_encoder_forward.1} parent=0 // pred_region
    _
  $region13: #{text_encoder_forward.1} parent=0 // pred_fallthru
    _
  // Predicated region
  $region14: #{text_encoder_forward.1} parent=0 // pred_check
    _
  $region15: #{text_encoder_forward.1} parent=0 // pred_check_branch
    %17 = sbr.rel (0) target = $region17
  $region16: #{text_encoder_forward.1} parent=0 // pred_region
    _
  $region17: #{text_encoder_forward.1} parent=0 // pred_fallthru
    _
  // Predicated region
  $region18: #{text_encoder_forward.1} parent=0 // pred_check
    _
  $region19: #{text_encoder_forward.1} parent=0 // pred_check_branch
    %19 = sbr.rel (0) target = $region21
  $region20: #{text_encoder_forward.1} parent=0 // pred_region
    _
  $region21: #{text_encoder_forward.1} parent=0 // pred_fallthru
    _
  %v21 = vld [vmem:[%s1] sm:$0xf]
  %v22 = vpack.c.bf16 %v21, %v21
  %v23 = vld [vmem:[%s2] sm:$0xf]
  %v24 = vld [vmem:[%s2 + $0x4] sm:$0xf]
  %v25 = vld [vmem:[%s2 + $0x8] sm:$0xf]
  %v26 = vld [vmem:[%s2 + $0xc] sm:$0xf]
  %v27 = vld [vmem:[%s2 + $0x10] sm:$0xf]
  %v28 = vld [vmem:[%s2 + $0x14] sm:$0xf]
  %v29 = vld [vmem:[%s2 + $0x18] sm:$0xf]
  %v30 = vld [vmem:[%s2 + $0x1c] sm:$0xf]
  %v31 = vld [vmem:[%s2 + $0x20] sm:$0xf]
  %v32 = vld [vmem:[%s2 + $0x24] sm:$0xf]
  %v33 = vld [vmem:[%s2 + $0x28] sm:$0xf]
  %v34 = vld [vmem:[%s2 + $0x2c] sm:$0xf]
  %v35 = vld [vmem:[%s2 + $0x30] sm:$0xf]
  %v36 = vld [vmem:[%s2 + $0x34] sm:$0xf]
  %v37 = vld [vmem:[%s2 + $0x38] sm:$0xf]
  %v38 = vld [vmem:[%s2 + $0x3c] sm:$0xf]
  %v39 = vld [vmem:[%s4] sm:$0x1]
  %v41 = vlaneseq
  %v42 = vshrl.u32 %v41, 7
  %v43 = vsub.s32 0, %v42
  %v44 = vrot.slane %v39, %v43
  %v62 = vunpack.c.l.b16 %v23
  %v63 = vunpack.c.l.b16 %v24
  %v64 = vunpack.c.l.b16 %v25
  %v65 = vunpack.c.l.b16 %v26
  %v66 = vunpack.c.l.b16 %v27
  %v67 = vunpack.c.l.b16 %v28
  %v68 = vunpack.c.l.b16 %v29
  %v69 = vunpack.c.l.b16 %v30
  %v70 = vunpack.c.l.b16 %v31
  %v71 = vunpack.c.l.b16 %v32
  %v72 = vunpack.c.l.b16 %v33
  %v73 = vunpack.c.l.b16 %v34
  %v74 = vunpack.c.l.b16 %v35
  %v75 = vunpack.c.l.b16 %v36
  %v76 = vunpack.c.l.b16 %v37
  %v77 = vunpack.c.l.b16 %v38
  %v78 = vpack.c.b16 %v63, %v62
  %v79 = vpack.c.b16 %v65, %v64
  %v80 = vpack.c.b16 %v67, %v66
  %v81 = vpack.c.b16 %v69, %v68
  %v82 = vpack.c.b16 %v71, %v70
  %v83 = vpack.c.b16 %v73, %v72
  %v84 = vpack.c.b16 %v75, %v74
  %v85 = vpack.c.b16 %v77, %v76
  %94 = vmatprep.subr.bf16.mxu0 0
  %95 = vmatpush1.bf16.msra.mxu0 %v78
  %96 = vmatprep.subr.bf16.mxu0 0
  %97 = vmatpush1.bf16.msra.mxu0 %v79
  %98 = vmatprep.subr.bf16.mxu0 0
  %99 = vmatpush1.bf16.msra.mxu0 %v80
  %100 = vmatprep.subr.bf16.mxu0 0
  %101 = vmatpush1.bf16.msra.mxu0 %v81
  %102 = vmatprep.subr.bf16.mxu0 0
  %103 = vmatpush1.bf16.msra.mxu0 %v82
  %104 = vmatprep.subr.bf16.mxu0 0
  %105 = vmatpush1.bf16.msra.mxu0 %v83
  %106 = vmatprep.subr.bf16.mxu0 0
  %107 = vmatpush1.bf16.msra.mxu0 %v84
  %108 = vmatprep.subr.bf16.mxu0 0
  %109 = vmatpush1.bf16.msra.mxu0 %v85
  %110 = vmatprep.subr.bf16.mxu0 0
  %111 = vmatpush1.bf16.msra.mxu0 0
  %112 = vmatprep.subr.bf16.mxu0 0
  %113 = vmatpush1.bf16.msra.mxu0 0
  %114 = vmatprep.subr.bf16.mxu0 0
  %115 = vmatpush1.bf16.msra.mxu0 0
  %116 = vmatprep.subr.bf16.mxu0 0
  %117 = vmatpush1.bf16.msra.mxu0 0
  %118 = vmatprep.subr.bf16.mxu0 0
  %119 = vmatpush1.bf16.msra.mxu0 0
  %120 = vmatprep.subr.bf16.mxu0 0
  %121 = vmatpush1.bf16.msra.mxu0 0
  %122 = vmatprep.subr.bf16.mxu0 0
  %123 = vmatpush1.bf16.msra.mxu0 0
  %124 = vmatprep.subr.bf16.mxu0 0
  %125 = vmatpush1.bf16.msra.mxu0 0
  %126 = vmatprep.mubr.bf16.mxu0 0
  %127 = vmatmul.mubr.bf16.gmra.mrb[0].mxu0 %v22
  %v128 = vpop.f32.mrb[0].mxu0
  %v129 = vadd.f32 %v44, %v128
  %v130 = vpop.f32.mrb[0].mxu0
  %v131 = vpop.f32.mrb[0].mxu0
  %v132 = vpop.f32.mrb[0].mxu0
  %133 = vdwg.mxu0
  %135 = vrot.lane.b32.xlu0 %v129, 120
  %v136 = vpop.permute.xlu0 %135
  %138 = vrot.lane.b32.xlu0 %v129, 112
  %v139 = vpop.permute.xlu0 %138
  %141 = vrot.lane.b32.xlu0 %v129, 104
  %v142 = vpop.permute.xlu0 %141
  %144 = vrot.lane.b32.xlu0 %v129, 96
  %v145 = vpop.permute.xlu0 %144
  %147 = vrot.lane.b32.xlu0 %v129, 88
  %v148 = vpop.permute.xlu0 %147
  %150 = vrot.lane.b32.xlu0 %v129, 80
  %v151 = vpop.permute.xlu0 %150
  %153 = vrot.lane.b32.xlu0 %v129, 72
  %v154 = vpop.permute.xlu0 %153
  %v156 = vcombine.low %v129, %v139
  %v158 = vunpack.c.l.s4 1983009808
  %v159 = vunpack.c.0.s8 %v158
  %v160 = vlaneseq
  %v161 = vshrl.u32 %v160, 7
  %v162 = vsub.s32 %v159, %v161
  %v163 = vrot.slane %v156, %v162
  %v164 = vcombine.low %v136, %v142
  %v166 = vunpack.c.l.s4 1983009808
  %v167 = vunpack.c.0.s8 %v166
  %v168 = vlaneseq
  %v169 = vshrl.u32 %v168, 7
  %v170 = vsub.s32 %v167, %v169
  %v171 = vrot.slane %v164, %v170
  %v172 = vcombine.low %v145, %v151
  %v174 = vunpack.c.l.s4 1983009808
  %v175 = vunpack.c.0.s8 %v174
  %v176 = vlaneseq
  %v177 = vshrl.u32 %v176, 7
  %v178 = vsub.s32 %v175, %v177
  %v179 = vrot.slane %v172, %v178
  %v180 = vcombine.low %v148, %v154
  %v182 = vunpack.c.l.s4 1983009808
  %v183 = vunpack.c.0.s8 %v182
  %v184 = vlaneseq
  %v185 = vshrl.u32 %v184, 7
  %v186 = vsub.s32 %v183, %v185
  %v187 = vrot.slane %v180, %v186
  %v188 = vcombine.low %v163, %v171
  %v189 = vcombine.high %v163, %v171
  %v191 = vunpack.c.l.s4 1934713408
  %v192 = vunpack.c.0.s8 %v191
  %v193 = vlaneseq
  %v194 = vshrl.u32 %v193, 7
  %v195 = vsub.s32 %v192, %v194
  %v196 = vrot.slane %v188, %v195
  %v198 = vunpack.c.l.s4 1934713408
  %v199 = vunpack.c.0.s8 %v198
  %v200 = vlaneseq
  %v201 = vshrl.u32 %v200, 7
  %v202 = vsub.s32 %v199, %v201
  %v203 = vrot.slane %v189, %v202
  %v204 = vcombine.low %v179, %v187
  %v205 = vcombine.high %v179, %v187
  %v207 = vunpack.c.l.s4 1934713408
  %v208 = vunpack.c.0.s8 %v207
  %v209 = vlaneseq
  %v210 = vshrl.u32 %v209, 7
  %v211 = vsub.s32 %v208, %v210
  %v212 = vrot.slane %v204, %v211
  %v214 = vunpack.c.l.s4 1934713408
  %v215 = vunpack.c.0.s8 %v214
  %v216 = vlaneseq
  %v217 = vshrl.u32 %v216, 7
  %v218 = vsub.s32 %v215, %v217
  %v219 = vrot.slane %v205, %v218
  %v220 = vcombine.low %v196, %v212
  %v221 = vcombine.high %v196, %v212
  %v222 = vcombine.low %v203, %v219
  %v223 = vcombine.high %v203, %v219
  %vm224 = vcmask 64512
  %v225 = vsel %vm224, %v220, -inf
  %226 = vmax.xlane.f32.xlu0 %v225
  %v227 = vpop.xlane.xlu0 %226
  %v228 = vsel %vm224, %v221, -inf
  %229 = vmax.xlane.f32.xlu0 %v228
  %v230 = vpop.xlane.xlu0 %229
  %v231 = vsel %vm224, %v222, -inf
  %232 = vmax.xlane.f32.xlu0 %v231
  %v233 = vpop.xlane.xlu0 %232
  %v234 = vsel %vm224, %v223, -inf
  %235 = vmax.xlane.f32.xlu0 %v234
  %v236 = vpop.xlane.xlu0 %235
  %v237 = vsub.f32 %v220, %v227
  %v238 = vsub.f32 %v221, %v230
  %v239 = vsub.f32 %v222, %v233
  %v240 = vsub.f32 %v223, %v236
  %v241 = vmul.f32 %v237, 1.442695
  %v242 = vpow.pop %v241
  %v243 = vmul.f32 %v238, 1.442695
  %v244 = vpow.pop %v243
  %v245 = vmul.f32 %v239, 1.442695
  %v246 = vpow.pop %v245
  %v247 = vmul.f32 %v240, 1.442695
  %v248 = vpow.pop %v247
  %v249 = vsel %vm224, %v242, 0.0
  %250 = vadd.xlane.f32.xlu0 %v249
  %v251 = vpop.xlane.xlu0 %250
  %v252 = vsel %vm224, %v244, 0.0
  %253 = vadd.xlane.f32.xlu0 %v252
  %v254 = vpop.xlane.xlu0 %253
  %v255 = vsel %vm224, %v246, 0.0
  %256 = vadd.xlane.f32.xlu0 %v255
  %v257 = vpop.xlane.xlu0 %256
  %v258 = vsel %vm224, %v248, 0.0
  %259 = vadd.xlane.f32.xlu0 %v258
  %v260 = vpop.xlane.xlu0 %259
  %v261 = vrcp.pop %v251
  %v262 = vrcp.pop %v254
  %v263 = vrcp.pop %v257
  %v264 = vrcp.pop %v260
  %v265 = vmul.f32 %v242, %v261
  %v266 = vmul.f32 %v244, %v262
  %v267 = vmul.f32 %v246, %v263
  %v268 = vmul.f32 %v248, %v264
  %v269 = vld [vmem:[%s3] sm:$0xf]
  %v270 = vld [vmem:[%s3 + $0x4] sm:$0xf]
  %v271 = vld [vmem:[%s3 + $0x8] sm:$0xf]
  %v272 = vld [vmem:[%s3 + $0xc] sm:$0xf]
  %v273 = vld [vmem:[%s3 + $0x10] sm:$0xf]
  %v274 = vld [vmem:[%s3 + $0x14] sm:$0xf]
  %v275 = vld [vmem:[%s3 + $0x18] sm:$0xf]
  %v276 = vld [vmem:[%s3 + $0x1c] sm:$0xf]
  %v277 = vunpack.c.l.bf16 %v269
  %v278 = vunpack.c.l.bf16 %v270
  %v279 = vunpack.c.l.bf16 %v271
  %v280 = vunpack.c.l.bf16 %v272
  %v281 = vunpack.c.l.bf16 %v273
  %v282 = vunpack.c.l.bf16 %v274
  %v283 = vunpack.c.l.bf16 %v275
  %v284 = vunpack.c.l.bf16 %v276
  %286 = vset.pattern.permute.xlu0 0
  %287 = vperm.xlu0 %286, %v265
  %v288 = vpop.permute.xlu0 %287
  %291 = vset.pattern.permute.xlu0 0
  %292 = vperm.xlu0 %291, %v266
  %v293 = vpop.permute.xlu0 %292
  %296 = vset.pattern.permute.xlu0 0
  %297 = vperm.xlu0 %296, %v267
  %v298 = vpop.permute.xlu0 %297
  %301 = vset.pattern.permute.xlu0 0
  %302 = vperm.xlu0 %301, %v268
  %v303 = vpop.permute.xlu0 %302
  %v313 = vrot.slane %v278, 7
  %vm314 = vcmask 1041409
  %v315 = vsel %vm314, %v313, %v277
  %v316 = vrot.slane %v279, 6
  %vm317 = vcmask 1042434
  %v318 = vsel %vm317, %v316, %v315
  %v319 = vrot.slane %v280, 5
  %vm320 = vcmask 1043459
  %v321 = vsel %vm320, %v319, %v318
  %v322 = vrot.slane %v281, 4
  %vm323 = vcmask 1044484
  %v324 = vsel %vm323, %v322, %v321
  %v325 = vrot.slane %v282, 3
  %vm326 = vcmask 1045509
  %v327 = vsel %vm326, %v325, %v324
  %v328 = vrot.slane %v283, 2
  %vm329 = vcmask 1046534
  %v330 = vsel %vm329, %v328, %v327
  %v331 = vrot.slane %v284, 1
  %vm332 = vcmask 1047559
  %v333 = vsel %vm332, %v331, %v330
  %v335 = vmul.f32 %v288, %v333
  %v336 = vmul.f32 %v293, %v333
  %v337 = vmul.f32 %v298, %v333
  %v338 = vmul.f32 %v303, %v333
  %v339 = vadd.f32 %v335, 0.0
  %v340 = vadd.f32 %v336, 0.0
  %v341 = vadd.f32 %v337, 0.0
  %v342 = vadd.f32 %v338, 0.0
  %343 = vset.pattern.permute.xlu0 1
  %344 = vperm.xlu0 %343, %v265
  %v345 = vpop.permute.xlu0 %344
  %347 = vset.pattern.permute.xlu0 1
  %348 = vperm.xlu0 %347, %v266
  %v349 = vpop.permute.xlu0 %348
  %351 = vset.pattern.permute.xlu0 1
  %352 = vperm.xlu0 %351, %v267
  %v353 = vpop.permute.xlu0 %352
  %355 = vset.pattern.permute.xlu0 1
  %356 = vperm.xlu0 %355, %v268
  %v357 = vpop.permute.xlu0 %356
  %v359 = vrot.slane %v277, 1
  %v360 = vsel %vm314, %v278, %v359
  %v361 = vrot.slane %v279, 7
  %v362 = vsel %vm317, %v361, %v360
  %v363 = vrot.slane %v280, 6
  %v364 = vsel %vm320, %v363, %v362
  %v365 = vrot.slane %v281, 5
  %v366 = vsel %vm323, %v365, %v364
  %v367 = vrot.slane %v282, 4
  %v368 = vsel %vm326, %v367, %v366
  %v369 = vrot.slane %v283, 3
  %v370 = vsel %vm329, %v369, %v368
  %v371 = vrot.slane %v284, 2
  %v372 = vsel %vm332, %v371, %v370
  %v374 = vmul.f32 %v345, %v372
  %v375 = vmul.f32 %v349, %v372
  %v376 = vmul.f32 %v353, %v372
  %v377 = vmul.f32 %v357, %v372
  %v378 = vadd.f32 %v339, %v374
  %v379 = vadd.f32 %v340, %v375
  %v380 = vadd.f32 %v341, %v376
  %v381 = vadd.f32 %v342, %v377
  %382 = vset.pattern.permute.xlu0 2
  %383 = vperm.xlu0 %382, %v265
  %v384 = vpop.permute.xlu0 %383
  %386 = vset.pattern.permute.xlu0 2
  %387 = vperm.xlu0 %386, %v266
  %v388 = vpop.permute.xlu0 %387
  %390 = vset.pattern.permute.xlu0 2
  %391 = vperm.xlu0 %390, %v267
  %v392 = vpop.permute.xlu0 %391
  %394 = vset.pattern.permute.xlu0 2
  %395 = vperm.xlu0 %394, %v268
  %v396 = vpop.permute.xlu0 %395
  %v398 = vrot.slane %v277, 2
  %v399 = vrot.slane %v278, 1
  %v400 = vsel %vm314, %v399, %v398
  %v401 = vsel %vm317, %v279, %v400
  %v402 = vrot.slane %v280, 7
  %v403 = vsel %vm320, %v402, %v401
  %v404 = vrot.slane %v281, 6
  %v405 = vsel %vm323, %v404, %v403
  %v406 = vrot.slane %v282, 5
  %v407 = vsel %vm326, %v406, %v405
  %v408 = vrot.slane %v283, 4
  %v409 = vsel %vm329, %v408, %v407
  %v410 = vrot.slane %v284, 3
  %v411 = vsel %vm332, %v410, %v409
  %v413 = vmul.f32 %v384, %v411
  %v414 = vmul.f32 %v388, %v411
  %v415 = vmul.f32 %v392, %v411
  %v416 = vmul.f32 %v396, %v411
  %v417 = vadd.f32 %v378, %v413
  %v418 = vadd.f32 %v379, %v414
  %v419 = vadd.f32 %v380, %v415
  %v420 = vadd.f32 %v381, %v416
  %421 = vset.pattern.permute.xlu0 3
  %422 = vperm.xlu0 %421, %v265
  %v423 = vpop.permute.xlu0 %422
  %425 = vset.pattern.permute.xlu0 3
  %426 = vperm.xlu0 %425, %v266
  %v427 = vpop.permute.xlu0 %426
  %429 = vset.pattern.permute.xlu0 3
  %430 = vperm.xlu0 %429, %v267
  %v431 = vpop.permute.xlu0 %430
  %433 = vset.pattern.permute.xlu0 3
  %434 = vperm.xlu0 %433, %v268
  %v435 = vpop.permute.xlu0 %434
  %v437 = vrot.slane %v277, 3
  %v438 = vrot.slane %v278, 2
  %v439 = vsel %vm314, %v438, %v437
  %v440 = vrot.slane %v279, 1
  %v441 = vsel %vm317, %v440, %v439
  %v442 = vsel %vm320, %v280, %v441
  %v443 = vrot.slane %v281, 7
  %v444 = vsel %vm323, %v443, %v442
  %v445 = vrot.slane %v282, 6
  %v446 = vsel %vm326, %v445, %v444
  %v447 = vrot.slane %v283, 5
  %v448 = vsel %vm329, %v447, %v446
  %v449 = vrot.slane %v284, 4
  %v450 = vsel %vm332, %v449, %v448
  %v452 = vmul.f32 %v423, %v450
  %v453 = vmul.f32 %v427, %v450
  %v454 = vmul.f32 %v431, %v450
  %v455 = vmul.f32 %v435, %v450
  %v456 = vadd.f32 %v417, %v452
  %v457 = vadd.f32 %v418, %v453
  %v458 = vadd.f32 %v419, %v454
  %v459 = vadd.f32 %v420, %v455
  %460 = vset.pattern.permute.xlu0 4
  %461 = vperm.xlu0 %460, %v265
  %v462 = vpop.permute.xlu0 %461
  %464 = vset.pattern.permute.xlu0 4
  %465 = vperm.xlu0 %464, %v266
  %v466 = vpop.permute.xlu0 %465
  %468 = vset.pattern.permute.xlu0 4
  %469 = vperm.xlu0 %468, %v267
  %v470 = vpop.permute.xlu0 %469
  %472 = vset.pattern.permute.xlu0 4
  %473 = vperm.xlu0 %472, %v268
  %v474 = vpop.permute.xlu0 %473
  %v476 = vrot.slane %v277, 4
  %v477 = vrot.slane %v278, 3
  %v478 = vsel %vm314, %v477, %v476
  %v479 = vrot.slane %v279, 2
  %v480 = vsel %vm317, %v479, %v478
  %v481 = vrot.slane %v280, 1
  %v482 = vsel %vm320, %v481, %v480
  %v483 = vsel %vm323, %v281, %v482
  %v484 = vrot.slane %v282, 7
  %v485 = vsel %vm326, %v484, %v483
  %v486 = vrot.slane %v283, 6
  %v487 = vsel %vm329, %v486, %v485
  %v488 = vrot.slane %v284, 5
  %v489 = vsel %vm332, %v488, %v487
  %v491 = vmul.f32 %v462, %v489
  %v492 = vmul.f32 %v466, %v489
  %v493 = vmul.f32 %v470, %v489
  %v494 = vmul.f32 %v474, %v489
  %v495 = vadd.f32 %v456, %v491
  %v496 = vadd.f32 %v457, %v492
  %v497 = vadd.f32 %v458, %v493
  %v498 = vadd.f32 %v459, %v494
  %499 = vset.pattern.permute.xlu0 5
  %500 = vperm.xlu0 %499, %v265
  %v501 = vpop.permute.xlu0 %500
  %503 = vset.pattern.permute.xlu0 5
  %504 = vperm.xlu0 %503, %v266
  %v505 = vpop.permute.xlu0 %504
  %507 = vset.pattern.permute.xlu0 5
  %508 = vperm.xlu0 %507, %v267
  %v509 = vpop.permute.xlu0 %508
  %511 = vset.pattern.permute.xlu0 5
  %512 = vperm.xlu0 %511, %v268
  %v513 = vpop.permute.xlu0 %512
  %v515 = vrot.slane %v277, 5
  %v516 = vrot.slane %v278, 4
  %v517 = vsel %vm314, %v516, %v515
  %v518 = vrot.slane %v279, 3
  %v519 = vsel %vm317, %v518, %v517
  %v520 = vrot.slane %v280, 2
  %v521 = vsel %vm320, %v520, %v519
  %v522 = vrot.slane %v281, 1
  %v523 = vsel %vm323, %v522, %v521
  %v524 = vsel %vm326, %v282, %v523
  %v525 = vrot.slane %v283, 7
  %v526 = vsel %vm329, %v525, %v524
  %v527 = vrot.slane %v284, 6
  %v528 = vsel %vm332, %v527, %v526
  %v530 = vmul.f32 %v501, %v528
  %v531 = vmul.f32 %v505, %v528
  %v532 = vmul.f32 %v509, %v528
  %v533 = vmul.f32 %v513, %v528
  %v534 = vadd.f32 %v495, %v530
  %v535 = vadd.f32 %v496, %v531
  %v536 = vadd.f32 %v497, %v532
  %v537 = vadd.f32 %v498, %v533
  %538 = vset.pattern.permute.xlu0 6
  %539 = vperm.xlu0 %538, %v265
  %v540 = vpop.permute.xlu0 %539
  %542 = vset.pattern.permute.xlu0 6
  %543 = vperm.xlu0 %542, %v266
  %v544 = vpop.permute.xlu0 %543
  %546 = vset.pattern.permute.xlu0 6
  %547 = vperm.xlu0 %546, %v267
  %v548 = vpop.permute.xlu0 %547
  %550 = vset.pattern.permute.xlu0 6
  %551 = vperm.xlu0 %550, %v268
  %v552 = vpop.permute.xlu0 %551
  %v554 = vrot.slane %v277, 6
  %v555 = vrot.slane %v278, 5
  %v556 = vsel %vm314, %v555, %v554
  %v557 = vrot.slane %v279, 4
  %v558 = vsel %vm317, %v557, %v556
  %v559 = vrot.slane %v280, 3
  %v560 = vsel %vm320, %v559, %v558
  %v561 = vrot.slane %v281, 2
  %v562 = vsel %vm323, %v561, %v560
  %v563 = vrot.slane %v282, 1
  %v564 = vsel %vm326, %v563, %v562
  %v565 = vsel %vm329, %v283, %v564
  %v566 = vrot.slane %v284, 7
  %v567 = vsel %vm332, %v566, %v565
  %v569 = vmul.f32 %v540, %v567
  %v570 = vmul.f32 %v544, %v567
  %v571 = vmul.f32 %v548, %v567
  %v572 = vmul.f32 %v552, %v567
  %v573 = vadd.f32 %v534, %v569
  %v574 = vadd.f32 %v535, %v570
  %v575 = vadd.f32 %v536, %v571
  %v576 = vadd.f32 %v537, %v572
  %577 = vset.pattern.permute.xlu0 7
  %578 = vperm.xlu0 %577, %v265
  %v579 = vpop.permute.xlu0 %578
  %581 = vset.pattern.permute.xlu0 7
  %582 = vperm.xlu0 %581, %v266
  %v583 = vpop.permute.xlu0 %582
  %585 = vset.pattern.permute.xlu0 7
  %586 = vperm.xlu0 %585, %v267
  %v587 = vpop.permute.xlu0 %586
  %589 = vset.pattern.permute.xlu0 7
  %590 = vperm.xlu0 %589, %v268
  %v591 = vpop.permute.xlu0 %590
  %v593 = vrot.slane %v277, 7
  %v594 = vrot.slane %v278, 6
  %v595 = vsel %vm314, %v594, %v593
  %v596 = vrot.slane %v279, 5
  %v597 = vsel %vm317, %v596, %v595
  %v598 = vrot.slane %v280, 4
  %v599 = vsel %vm320, %v598, %v597
  %v600 = vrot.slane %v281, 3
  %v601 = vsel %vm323, %v600, %v599
  %v602 = vrot.slane %v282, 2
  %v603 = vsel %vm326, %v602, %v601
  %v604 = vrot.slane %v283, 1
  %v605 = vsel %vm329, %v604, %v603
  %v606 = vsel %vm332, %v284, %v605
  %v608 = vmul.f32 %v579, %v606
  %v609 = vmul.f32 %v583, %v606
  %v610 = vmul.f32 %v587, %v606
  %v611 = vmul.f32 %v591, %v606
  %v612 = vadd.f32 %v573, %v608
  %v613 = vadd.f32 %v574, %v609
  %v614 = vadd.f32 %v575, %v610
  %v615 = vadd.f32 %v576, %v611
  %v616 = vmul.f32 %v612, %v612
  %v617 = vmul.f32 %v613, %v613
  %v618 = vmul.f32 %v614, %v614
  %v619 = vmul.f32 %v615, %v615
  %620 = vadd.xlane.f32.xlu0 %v616
  %v621 = vpop.xlane.xlu0 %620
  %622 = vadd.xlane.f32.xlu0 %v617
  %v623 = vpop.xlane.xlu0 %622
  %624 = vadd.xlane.f32.xlu0 %v618
  %v625 = vpop.xlane.xlu0 %624
  %626 = vadd.xlane.f32.xlu0 %v619
  %v627 = vpop.xlane.xlu0 %626
  %v628 = vadd.f32 %v621, 1e-12
  %v629 = vadd.f32 %v623, 1e-12
  %v630 = vadd.f32 %v625, 1e-12
  %v631 = vadd.f32 %v627, 1e-12
  %v632 = vrsqrt.pop %v628
  %v633 = vrsqrt.pop %v629
  %v634 = vrsqrt.pop %v630
  %v635 = vrsqrt.pop %v631
  %v636 = vmul.f32 %v612, %v632
  %v637 = vmul.f32 %v613, %v633
  %v638 = vmul.f32 %v614, %v634
  %v639 = vmul.f32 %v615, %v635
  %640 = vst [vmem:[%s5] sm:$0xff] %v636
  %641 = vst [vmem:[%s5 + $0x8] sm:$0xff] %v637
  %642 = vst [vmem:[%s5 + $0x10] sm:$0xff] %v638
  %643 = vst [vmem:[%s5 + $0x18] sm:$0xff] %v639
  %v644 = vld [vmem:[%s0 + $0x1] sm:$0x1]
  %v645 = vld [vmem:[%s0 + $0x5] sm:$0x1]
  %v646 = vld [vmem:[%s0 + $0x9] sm:$0x1]
  %v647 = vld [vmem:[%s0 + $0xd] sm:$0x1]
  %v648 = vpack.c.bf16 %v644, %v644
  %v649 = vpack.c.bf16 %v645, %v645
  %v650 = vpack.c.bf16 %v646, %v646
  %v651 = vpack.c.bf16 %v647, %v647
  %s652 = scalar_lea.vmem %s2, 64
  %v653 = vld [vmem:[%s652] sm:$0xf]
  %v654 = vld [vmem:[%s652 + $0x4] sm:$0xf]
  %v655 = vld [vmem:[%s652 + $0x8] sm:$0xf]
  %v656 = vld [vmem:[%s652 + $0xc] sm:$0xf]
  %v657 = vld [vmem:[%s652 + $0x10] sm:$0xf]
  %v658 = vld [vmem:[%s652 + $0x14] sm:$0xf]
  %v659 = vld [vmem:[%s652 + $0x18] sm:$0xf]
  %v660 = vld [vmem:[%s652 + $0x1c] sm:$0xf]
  %v661 = vld [vmem:[%s652 + $0x20] sm:$0xf]
  %v662 = vld [vmem:[%s652 + $0x24] sm:$0xf]
  %v663 = vld [vmem:[%s652 + $0x28] sm:$0xf]
  %v664 = vld [vmem:[%s652 + $0x2c] sm:$0xf]
  %v665 = vld [vmem:[%s652 + $0x30] sm:$0xf]
  %v666 = vld [vmem:[%s652 + $0x34] sm:$0xf]
  %v667 = vld [vmem:[%s652 + $0x38] sm:$0xf]
  %v668 = vld [vmem:[%s652 + $0x3c] sm:$0xf]
  %s669 = scalar_lea.vmem %s4, 1
  %v670 = vld [vmem:[%s669] sm:$0x1]
  %v672 = vlaneseq
  %v673 = vshrl.u32 %v672, 7
  %v674 = vsub.s32 0, %v673
  %v675 = vrot.slane %v670, %v674
  %v681 = vunpack.c.l.b16 %v648
  %v682 = vunpack.c.l.b16 %v649
  %v683 = vunpack.c.l.b16 %v650
  %v684 = vunpack.c.l.b16 %v651
  %v685 = vrot.slane %v682, 7
  %v686 = vsel %vm314, %v685, %v681
  %v687 = vrot.slane %v683, 6
  %v688 = vsel %vm317, %v687, %v686
  %v689 = vrot.slane %v684, 5
  %v690 = vsel %vm320, %v689, %v688
  %v691 = vpack.c.b16 %v690, %v690
  %v709 = vunpack.c.l.b16 %v653
  %v710 = vunpack.c.l.b16 %v654
  %v711 = vunpack.c.l.b16 %v655
  %v712 = vunpack.c.l.b16 %v656
  %v713 = vunpack.c.l.b16 %v657
  %v714 = vunpack.c.l.b16 %v658
  %v715 = vunpack.c.l.b16 %v659
  %v716 = vunpack.c.l.b16 %v660
  %v717 = vunpack.c.l.b16 %v661
  %v718 = vunpack.c.l.b16 %v662
  %v719 = vunpack.c.l.b16 %v663
  %v720 = vunpack.c.l.b16 %v664
  %v721 = vunpack.c.l.b16 %v665
  %v722 = vunpack.c.l.b16 %v666
  %v723 = vunpack.c.l.b16 %v667
  %v724 = vunpack.c.l.b16 %v668
  %v725 = vpack.c.b16 %v710, %v709
  %v726 = vpack.c.b16 %v712, %v711
  %v727 = vpack.c.b16 %v714, %v713
  %v728 = vpack.c.b16 %v716, %v715
  %v729 = vpack.c.b16 %v718, %v717
  %v730 = vpack.c.b16 %v720, %v719
  %v731 = vpack.c.b16 %v722, %v721
  %v732 = vpack.c.b16 %v724, %v723
  %741 = vmatprep.subr.bf16.mxu0 0
  %742 = vmatpush1.bf16.msra.mxu0 %v725
  %743 = vmatprep.subr.bf16.mxu0 0
  %744 = vmatpush1.bf16.msra.mxu0 %v726
  %745 = vmatprep.subr.bf16.mxu0 0
  %746 = vmatpush1.bf16.msra.mxu0 %v727
  %747 = vmatprep.subr.bf16.mxu0 0
  %748 = vmatpush1.bf16.msra.mxu0 %v728
  %749 = vmatprep.subr.bf16.mxu0 0
  %750 = vmatpush1.bf16.msra.mxu0 %v729
  %751 = vmatprep.subr.bf16.mxu0 0
  %752 = vmatpush1.bf16.msra.mxu0 %v730
  %753 = vmatprep.subr.bf16.mxu0 0
  %754 = vmatpush1.bf16.msra.mxu0 %v731
  %755 = vmatprep.subr.bf16.mxu0 0
  %756 = vmatpush1.bf16.msra.mxu0 %v732
  %757 = vmatprep.subr.bf16.mxu0 0
  %758 = vmatpush1.bf16.msra.mxu0 0
  %759 = vmatprep.subr.bf16.mxu0 0
  %760 = vmatpush1.bf16.msra.mxu0 0
  %761 = vmatprep.subr.bf16.mxu0 0
  %762 = vmatpush1.bf16.msra.mxu0 0
  %763 = vmatprep.subr.bf16.mxu0 0
  %764 = vmatpush1.bf16.msra.mxu0 0
  %765 = vmatprep.subr.bf16.mxu0 0
  %766 = vmatpush1.bf16.msra.mxu0 0
  %767 = vmatprep.subr.bf16.mxu0 0
  %768 = vmatpush1.bf16.msra.mxu0 0
  %769 = vmatprep.subr.bf16.mxu0 0
  %770 = vmatpush1.bf16.msra.mxu0 0
  %771 = vmatprep.subr.bf16.mxu0 0
  %772 = vmatpush1.bf16.msra.mxu0 0
  %773 = vmatprep.mubr.bf16.mxu0 0
  %774 = vmatmul.mubr.bf16.gmra.mrb[0].mxu0 %v691
  %v775 = vpop.f32.mrb[0].mxu0
  %v776 = vadd.f32 %v675, %v775
  %v777 = vpop.f32.mrb[0].mxu0
  %v778 = vpop.f32.mrb[0].mxu0
  %v779 = vpop.f32.mrb[0].mxu0
  %780 = vdwg.mxu0
  %782 = vrot.lane.b32.xlu0 %v776, 120
  %v783 = vpop.permute.xlu0 %782
  %785 = vrot.lane.b32.xlu0 %v776, 112
  %v786 = vpop.permute.xlu0 %785
  %788 = vrot.lane.b32.xlu0 %v776, 104
  %v789 = vpop.permute.xlu0 %788
  %791 = vrot.lane.b32.xlu0 %v776, 96
  %v792 = vpop.permute.xlu0 %791
  %794 = vrot.lane.b32.xlu0 %v776, 88
  %v795 = vpop.permute.xlu0 %794
  %797 = vrot.lane.b32.xlu0 %v776, 80
  %v798 = vpop.permute.xlu0 %797
  %800 = vrot.lane.b32.xlu0 %v776, 72
  %v801 = vpop.permute.xlu0 %800
  %v803 = vcombine.low %v776, %v786
  %v805 = vunpack.c.l.s4 1983009808
  %v806 = vunpack.c.0.s8 %v805
  %v807 = vlaneseq
  %v808 = vshrl.u32 %v807, 7
  %v809 = vsub.s32 %v806, %v808
  %v810 = vrot.slane %v803, %v809
  %v811 = vcombine.low %v783, %v789
  %v813 = vunpack.c.l.s4 1983009808
  %v814 = vunpack.c.0.s8 %v813
  %v815 = vlaneseq
  %v816 = vshrl.u32 %v815, 7
  %v817 = vsub.s32 %v814, %v816
  %v818 = vrot.slane %v811, %v817
  %v819 = vcombine.low %v792, %v798
  %v821 = vunpack.c.l.s4 1983009808
  %v822 = vunpack.c.0.s8 %v821
  %v823 = vlaneseq
  %v824 = vshrl.u32 %v823, 7
  %v825 = vsub.s32 %v822, %v824
  %v826 = vrot.slane %v819, %v825
  %v827 = vcombine.low %v795, %v801
  %v829 = vunpack.c.l.s4 1983009808
  %v830 = vunpack.c.0.s8 %v829
  %v831 = vlaneseq
  %v832 = vshrl.u32 %v831, 7
  %v833 = vsub.s32 %v830, %v832
  %v834 = vrot.slane %v827, %v833
  %v835 = vcombine.low %v810, %v818
  %v836 = vcombine.high %v810, %v818
  %v838 = vunpack.c.l.s4 1934713408
  %v839 = vunpack.c.0.s8 %v838
  %v840 = vlaneseq
  %v841 = vshrl.u32 %v840, 7
  %v842 = vsub.s32 %v839, %v841
  %v843 = vrot.slane %v835, %v842
  %v845 = vunpack.c.l.s4 1934713408
  %v846 = vunpack.c.0.s8 %v845
  %v847 = vlaneseq
  %v848 = vshrl.u32 %v847, 7
  %v849 = vsub.s32 %v846, %v848
  %v850 = vrot.slane %v836, %v849
  %v851 = vcombine.low %v826, %v834
  %v852 = vcombine.high %v826, %v834
  %v854 = vunpack.c.l.s4 1934713408
  %v855 = vunpack.c.0.s8 %v854
  %v856 = vlaneseq
  %v857 = vshrl.u32 %v856, 7
  %v858 = vsub.s32 %v855, %v857
  %v859 = vrot.slane %v851, %v858
  %v861 = vunpack.c.l.s4 1934713408
  %v862 = vunpack.c.0.s8 %v861
  %v863 = vlaneseq
  %v864 = vshrl.u32 %v863, 7
  %v865 = vsub.s32 %v862, %v864
  %v866 = vrot.slane %v852, %v865
  %v867 = vcombine.low %v843, %v859
  %v868 = vcombine.high %v843, %v859
  %v869 = vcombine.low %v850, %v866
  %v870 = vcombine.high %v850, %v866
  %v871 = vsel %vm224, %v867, -inf
  %872 = vmax.xlane.f32.xlu0 %v871
  %v873 = vpop.xlane.xlu0 %872
  %v874 = vsel %vm224, %v868, -inf
  %875 = vmax.xlane.f32.xlu0 %v874
  %v876 = vpop.xlane.xlu0 %875
  %v877 = vsel %vm224, %v869, -inf
  %878 = vmax.xlane.f32.xlu0 %v877
  %v879 = vpop.xlane.xlu0 %878
  %v880 = vsel %vm224, %v870, -inf
  %881 = vmax.xlane.f32.xlu0 %v880
  %v882 = vpop.xlane.xlu0 %881
  %v883 = vsub.f32 %v867, %v873
  %v884 = vsub.f32 %v868, %v876
  %v885 = vsub.f32 %v869, %v879
  %v886 = vsub.f32 %v870, %v882
  %v887 = vmul.f32 %v883, 1.442695
  %v888 = vpow.pop %v887
  %v889 = vmul.f32 %v884, 1.442695
  %v890 = vpow.pop %v889
  %v891 = vmul.f32 %v885, 1.442695
  %v892 = vpow.pop %v891
  %v893 = vmul.f32 %v886, 1.442695
  %v894 = vpow.pop %v893
  %v895 = vsel %vm224, %v888, 0.0
  %896 = vadd.xlane.f32.xlu0 %v895
  %v897 = vpop.xlane.xlu0 %896
  %v898 = vsel %vm224, %v890, 0.0
  %899 = vadd.xlane.f32.xlu0 %v898
  %v900 = vpop.xlane.xlu0 %899
  %v901 = vsel %vm224, %v892, 0.0
  %902 = vadd.xlane.f32.xlu0 %v901
  %v903 = vpop.xlane.xlu0 %902
  %v904 = vsel %vm224, %v894, 0.0
  %905 = vadd.xlane.f32.xlu0 %v904
  %v906 = vpop.xlane.xlu0 %905
  %v907 = vrcp.pop %v897
  %v908 = vrcp.pop %v900
  %v909 = vrcp.pop %v903
  %v910 = vrcp.pop %v906
  %v911 = vmul.f32 %v888, %v907
  %v912 = vmul.f32 %v890, %v908
  %v913 = vmul.f32 %v892, %v909
  %v914 = vmul.f32 %v894, %v910
  %s915 = scalar_lea.vmem %s3, 32
  %v916 = vld [vmem:[%s915] sm:$0xf]
  %v917 = vld [vmem:[%s915 + $0x4] sm:$0xf]
  %v918 = vld [vmem:[%s915 + $0x8] sm:$0xf]
  %v919 = vld [vmem:[%s915 + $0xc] sm:$0xf]
  %v920 = vld [vmem:[%s915 + $0x10] sm:$0xf]
  %v921 = vld [vmem:[%s915 + $0x14] sm:$0xf]
  %v922 = vld [vmem:[%s915 + $0x18] sm:$0xf]
  %v923 = vld [vmem:[%s915 + $0x1c] sm:$0xf]
  %v924 = vunpack.c.l.bf16 %v916
  %v925 = vunpack.c.l.bf16 %v917
  %v926 = vunpack.c.l.bf16 %v918
  %v927 = vunpack.c.l.bf16 %v919
  %v928 = vunpack.c.l.bf16 %v920
  %v929 = vunpack.c.l.bf16 %v921
  %v930 = vunpack.c.l.bf16 %v922
  %v931 = vunpack.c.l.bf16 %v923
  %933 = vset.pattern.permute.xlu0 0
  %934 = vperm.xlu0 %933, %v911
  %v935 = vpop.permute.xlu0 %934
  %938 = vset.pattern.permute.xlu0 0
  %939 = vperm.xlu0 %938, %v912
  %v940 = vpop.permute.xlu0 %939
  %943 = vset.pattern.permute.xlu0 0
  %944 = vperm.xlu0 %943, %v913
  %v945 = vpop.permute.xlu0 %944
  %948 = vset.pattern.permute.xlu0 0
  %949 = vperm.xlu0 %948, %v914
  %v950 = vpop.permute.xlu0 %949
  %v960 = vrot.slane %v925, 7
  %v961 = vsel %vm314, %v960, %v924
  %v962 = vrot.slane %v926, 6
  %v963 = vsel %vm317, %v962, %v961
  %v964 = vrot.slane %v927, 5
  %v965 = vsel %vm320, %v964, %v963
  %v966 = vrot.slane %v928, 4
  %v967 = vsel %vm323, %v966, %v965
  %v968 = vrot.slane %v929, 3
  %v969 = vsel %vm326, %v968, %v967
  %v970 = vrot.slane %v930, 2
  %v971 = vsel %vm329, %v970, %v969
  %v972 = vrot.slane %v931, 1
  %v973 = vsel %vm332, %v972, %v971
  %v975 = vmul.f32 %v935, %v973
  %v976 = vmul.f32 %v940, %v973
  %v977 = vmul.f32 %v945, %v973
  %v978 = vmul.f32 %v950, %v973
  %v979 = vadd.f32 %v975, 0.0
  %v980 = vadd.f32 %v976, 0.0
  %v981 = vadd.f32 %v977, 0.0
  %v982 = vadd.f32 %v978, 0.0
  %983 = vset.pattern.permute.xlu0 1
  %984 = vperm.xlu0 %983, %v911
  %v985 = vpop.permute.xlu0 %984
  %987 = vset.pattern.permute.xlu0 1
  %988 = vperm.xlu0 %987, %v912
  %v989 = vpop.permute.xlu0 %988
  %991 = vset.pattern.permute.xlu0 1
  %992 = vperm.xlu0 %991, %v913
  %v993 = vpop.permute.xlu0 %992
  %995 = vset.pattern.permute.xlu0 1
  %996 = vperm.xlu0 %995, %v914
  %v997 = vpop.permute.xlu0 %996
  %v999 = vrot.slane %v924, 1
  %v1000 = vsel %vm314, %v925, %v999
  %v1001 = vrot.slane %v926, 7
  %v1002 = vsel %vm317, %v1001, %v1000
  %v1003 = vrot.slane %v927, 6
  %v1004 = vsel %vm320, %v1003, %v1002
  %v1005 = vrot.slane %v928, 5
  %v1006 = vsel %vm323, %v1005, %v1004
  %v1007 = vrot.slane %v929, 4
  %v1008 = vsel %vm326, %v1007, %v1006
  %v1009 = vrot.slane %v930, 3
  %v1010 = vsel %vm329, %v1009, %v1008
  %v1011 = vrot.slane %v931, 2
  %v1012 = vsel %vm332, %v1011, %v1010
  %v1014 = vmul.f32 %v985, %v1012
  %v1015 = vmul.f32 %v989, %v1012
  %v1016 = vmul.f32 %v993, %v1012
  %v1017 = vmul.f32 %v997, %v1012
  %v1018 = vadd.f32 %v979, %v1014
  %v1019 = vadd.f32 %v980, %v1015
  %v1020 = vadd.f32 %v981, %v1016
  %v1021 = vadd.f32 %v982, %v1017
  %1022 = vset.pattern.permute.xlu0 2
  %1023 = vperm.xlu0 %1022, %v911
  %v1024 = vpop.permute.xlu0 %1023
  %1026 = vset.pattern.permute.xlu0 2
  %1027 = vperm.xlu0 %1026, %v912
  %v1028 = vpop.permute.xlu0 %1027
  %1030 = vset.pattern.permute.xlu0 2
  %1031 = vperm.xlu0 %1030, %v913
  %v1032 = vpop.permute.xlu0 %1031
  %1034 = vset.pattern.permute.xlu0 2
  %1035 = vperm.xlu0 %1034, %v914
  %v1036 = vpop.permute.xlu0 %1035
  %v1038 = vrot.slane %v924, 2
  %v1039 = vrot.slane %v925, 1
  %v1040 = vsel %vm314, %v1039, %v1038
  %v1041 = vsel %vm317, %v926, %v1040
  %v1042 = vrot.slane %v927, 7
  %v1043 = vsel %vm320, %v1042, %v1041
  %v1044 = vrot.slane %v928, 6
  %v1045 = vsel %vm323, %v1044, %v1043
  %v1046 = vrot.slane %v929, 5
  %v1047 = vsel %vm326, %v1046, %v1045
  %v1048 = vrot.slane %v930, 4
  %v1049 = vsel %vm329, %v1048, %v1047
  %v1050 = vrot.slane %v931, 3
  %v1051 = vsel %vm332, %v1050, %v1049
  %v1053 = vmul.f32 %v1024, %v1051
  %v1054 = vmul.f32 %v1028, %v1051
  %v1055 = vmul.f32 %v1032, %v1051
  %v1056 = vmul.f32 %v1036, %v1051
  %v1057 = vadd.f32 %v1018, %v1053
  %v1058 = vadd.f32 %v1019, %v1054
  %v1059 = vadd.f32 %v1020, %v1055
  %v1060 = vadd.f32 %v1021, %v1056
  %1061 = vset.pattern.permute.xlu0 3
  %1062 = vperm.xlu0 %1061, %v911
  %v1063 = vpop.permute.xlu0 %1062
  %1065 = vset.pattern.permute.xlu0 3
  %1066 = vperm.xlu0 %1065, %v912
  %v1067 = vpop.permute.xlu0 %1066
  %1069 = vset.pattern.permute.xlu0 3
  %1070 = vperm.xlu0 %1069, %v913
  %v1071 = vpop.permute.xlu0 %1070
  %1073 = vset.pattern.permute.xlu0 3
  %1074 = vperm.xlu0 %1073, %v914
  %v1075 = vpop.permute.xlu0 %1074
  %v1077 = vrot.slane %v924, 3
  %v1078 = vrot.slane %v925, 2
  %v1079 = vsel %vm314, %v1078, %v1077
  %v1080 = vrot.slane %v926, 1
  %v1081 = vsel %vm317, %v1080, %v1079
  %v1082 = vsel %vm320, %v927, %v1081
  %v1083 = vrot.slane %v928, 7
  %v1084 = vsel %vm323, %v1083, %v1082
  %v1085 = vrot.slane %v929, 6
  %v1086 = vsel %vm326, %v1085, %v1084
  %v1087 = vrot.slane %v930, 5
  %v1088 = vsel %vm329, %v1087, %v1086
  %v1089 = vrot.slane %v931, 4
  %v1090 = vsel %vm332, %v1089, %v1088
  %v1092 = vmul.f32 %v1063, %v1090
  %v1093 = vmul.f32 %v1067, %v1090
  %v1094 = vmul.f32 %v1071, %v1090
  %v1095 = vmul.f32 %v1075, %v1090
  %v1096 = vadd.f32 %v1057, %v1092
  %v1097 = vadd.f32 %v1058, %v1093
  %v1098 = vadd.f32 %v1059, %v1094
  %v1099 = vadd.f32 %v1060, %v1095
  %1100 = vset.pattern.permute.xlu0 4
  %1101 = vperm.xlu0 %1100, %v911
  %v1102 = vpop.permute.xlu0 %1101
  %1104 = vset.pattern.permute.xlu0 4
  %1105 = vperm.xlu0 %1104, %v912
  %v1106 = vpop.permute.xlu0 %1105
  %1108 = vset.pattern.permute.xlu0 4
  %1109 = vperm.xlu0 %1108, %v913
  %v1110 = vpop.permute.xlu0 %1109
  %1112 = vset.pattern.permute.xlu0 4
  %1113 = vperm.xlu0 %1112, %v914
  %v1114 = vpop.permute.xlu0 %1113
  %v1116 = vrot.slane %v924, 4
  %v1117 = vrot.slane %v925, 3
  %v1118 = vsel %vm314, %v1117, %v1116
  %v1119 = vrot.slane %v926, 2
  %v1120 = vsel %vm317, %v1119, %v1118
  %v1121 = vrot.slane %v927, 1
  %v1122 = vsel %vm320, %v1121, %v1120
  %v1123 = vsel %vm323, %v928, %v1122
  %v1124 = vrot.slane %v929, 7
  %v1125 = vsel %vm326, %v1124, %v1123
  %v1126 = vrot.slane %v930, 6
  %v1127 = vsel %vm329, %v1126, %v1125
  %v1128 = vrot.slane %v931, 5
  %v1129 = vsel %vm332, %v1128, %v1127
  %v1131 = vmul.f32 %v1102, %v1129
  %v1132 = vmul.f32 %v1106, %v1129
  %v1133 = vmul.f32 %v1110, %v1129
  %v1134 = vmul.f32 %v1114, %v1129
  %v1135 = vadd.f32 %v1096, %v1131
  %v1136 = vadd.f32 %v1097, %v1132
  %v1137 = vadd.f32 %v1098, %v1133
  %v1138 = vadd.f32 %v1099, %v1134
  %1139 = vset.pattern.permute.xlu0 5
  %1140 = vperm.xlu0 %1139, %v911
  %v1141 = vpop.permute.xlu0 %1140
  %1143 = vset.pattern.permute.xlu0 5
  %1144 = vperm.xlu0 %1143, %v912
  %v1145 = vpop.permute.xlu0 %1144
  %1147 = vset.pattern.permute.xlu0 5
  %1148 = vperm.xlu0 %1147, %v913
  %v1149 = vpop.permute.xlu0 %1148
  %1151 = vset.pattern.permute.xlu0 5
  %1152 = vperm.xlu0 %1151, %v914
  %v1153 = vpop.permute.xlu0 %1152
  %v1155 = vrot.slane %v924, 5
  %v1156 = vrot.slane %v925, 4
  %v1157 = vsel %vm314, %v1156, %v1155
  %v1158 = vrot.slane %v926, 3
  %v1159 = vsel %vm317, %v1158, %v1157
  %v1160 = vrot.slane %v927, 2
  %v1161 = vsel %vm320, %v1160, %v1159
  %v1162 = vrot.slane %v928, 1
  %v1163 = vsel %vm323, %v1162, %v1161
  %v1164 = vsel %vm326, %v929, %v1163
  %v1165 = vrot.slane %v930, 7
  %v1166 = vsel %vm329, %v1165, %v1164
  %v1167 = vrot.slane %v931, 6
  %v1168 = vsel %vm332, %v1167, %v1166
  %v1170 = vmul.f32 %v1141, %v1168
  %v1171 = vmul.f32 %v1145, %v1168
  %v1172 = vmul.f32 %v1149, %v1168
  %v1173 = vmul.f32 %v1153, %v1168
  %v1174 = vadd.f32 %v1135, %v1170
  %v1175 = vadd.f32 %v1136, %v1171
  %v1176 = vadd.f32 %v1137, %v1172
  %v1177 = vadd.f32 %v1138, %v1173
  %1178 = vset.pattern.permute.xlu0 6
  %1179 = vperm.xlu0 %1178, %v911
  %v1180 = vpop.permute.xlu0 %1179
  %1182 = vset.pattern.permute.xlu0 6
  %1183 = vperm.xlu0 %1182, %v912
  %v1184 = vpop.permute.xlu0 %1183
  %1186 = vset.pattern.permute.xlu0 6
  %1187 = vperm.xlu0 %1186, %v913
  %v1188 = vpop.permute.xlu0 %1187
  %1190 = vset.pattern.permute.xlu0 6
  %1191 = vperm.xlu0 %1190, %v914
  %v1192 = vpop.permute.xlu0 %1191
  %v1194 = vrot.slane %v924, 6
  %v1195 = vrot.slane %v925, 5
  %v1196 = vsel %vm314, %v1195, %v1194
  %v1197 = vrot.slane %v926, 4
  %v1198 = vsel %vm317, %v1197, %v1196
  %v1199 = vrot.slane %v927, 3
  %v1200 = vsel %vm320, %v1199, %v1198
  %v1201 = vrot.slane %v928, 2
  %v1202 = vsel %vm323, %v1201, %v1200
  %v1203 = vrot.slane %v929, 1
  %v1204 = vsel %vm326, %v1203, %v1202
  %v1205 = vsel %vm329, %v930, %v1204
  %v1206 = vrot.slane %v931, 7
  %v1207 = vsel %vm332, %v1206, %v1205
  %v1209 = vmul.f32 %v1180, %v1207
  %v1210 = vmul.f32 %v1184, %v1207
  %v1211 = vmul.f32 %v1188, %v1207
  %v1212 = vmul.f32 %v1192, %v1207
  %v1213 = vadd.f32 %v1174, %v1209
  %v1214 = vadd.f32 %v1175, %v1210
  %v1215 = vadd.f32 %v1176, %v1211
  %v1216 = vadd.f32 %v1177, %v1212
  %1217 = vset.pattern.permute.xlu0 7
  %1218 = vperm.xlu0 %1217, %v911
  %v1219 = vpop.permute.xlu0 %1218
  %1221 = vset.pattern.permute.xlu0 7
  %1222 = vperm.xlu0 %1221, %v912
  %v1223 = vpop.permute.xlu0 %1222
  %1225 = vset.pattern.permute.xlu0 7
  %1226 = vperm.xlu0 %1225, %v913
  %v1227 = vpop.permute.xlu0 %1226
  %1229 = vset.pattern.permute.xlu0 7
  %1230 = vperm.xlu0 %1229, %v914
  %v1231 = vpop.permute.xlu0 %1230
  %v1233 = vrot.slane %v924, 7
  %v1234 = vrot.slane %v925, 6
  %v1235 = vsel %vm314, %v1234, %v1233
  %v1236 = vrot.slane %v926, 5
  %v1237 = vsel %vm317, %v1236, %v1235
  %v1238 = vrot.slane %v927, 4
  %v1239 = vsel %vm320, %v1238, %v1237
  %v1240 = vrot.slane %v928, 3
  %v1241 = vsel %vm323, %v1240, %v1239
  %v1242 = vrot.slane %v929, 2
  %v1243 = vsel %vm326, %v1242, %v1241
  %v1244 = vrot.slane %v930, 1
  %v1245 = vsel %vm329, %v1244, %v1243
  %v1246 = vsel %vm332, %v931, %v1245
  %v1248 = vmul.f32 %v1219, %v1246
  %v1249 = vmul.f32 %v1223, %v1246
  %v1250 = vmul.f32 %v1227, %v1246
  %v1251 = vmul.f32 %v1231, %v1246
  %v1252 = vadd.f32 %v1213, %v1248
  %v1253 = vadd.f32 %v1214, %v1249
  %v1254 = vadd.f32 %v1215, %v1250
  %v1255 = vadd.f32 %v1216, %v1251
  %v1256 = vmul.f32 %v1252, %v1252
  %v1257 = vmul.f32 %v1253, %v1253
  %v1258 = vmul.f32 %v1254, %v1254
  %v1259 = vmul.f32 %v1255, %v1255
  %1260 = vadd.xlane.f32.xlu0 %v1256
  %v1261 = vpop.xlane.xlu0 %1260
  %1262 = vadd.xlane.f32.xlu0 %v1257
  %v1263 = vpop.xlane.xlu0 %1262
  %1264 = vadd.xlane.f32.xlu0 %v1258
  %v1265 = vpop.xlane.xlu0 %1264
  %1266 = vadd.xlane.f32.xlu0 %v1259
  %v1267 = vpop.xlane.xlu0 %1266
  %v1268 = vadd.f32 %v1261, 1e-12
  %v1269 = vadd.f32 %v1263, 1e-12
  %v1270 = vadd.f32 %v1265, 1e-12
  %v1271 = vadd.f32 %v1267, 1e-12
  %v1272 = vrsqrt.pop %v1268
  %v1273 = vrsqrt.pop %v1269
  %v1274 = vrsqrt.pop %v1270
  %v1275 = vrsqrt.pop %v1271
  %v1276 = vmul.f32 %v1252, %v1272
  %v1277 = vmul.f32 %v1253, %v1273
  %v1278 = vmul.f32 %v1254, %v1274
  %v1279 = vmul.f32 %v1255, %v1275
  %s1280 = scalar_lea.vmem %s5, 32
  %1281 = vst [vmem:[%s1280] sm:$0xff] %v1276
  %1282 = vst [vmem:[%s1280 + $0x8] sm:$0xff] %v1277
  %1283 = vst [vmem:[%s1280 + $0x10] sm:$0xff] %v1278
  %1284 = vst [vmem:[%s1280 + $0x18] sm:$0xff] %v1279
  %v1285 = vld [vmem:[%s0 + $0x2] sm:$0x1]
  %v1286 = vld [vmem:[%s0 + $0x6] sm:$0x1]
  %v1287 = vld [vmem:[%s0 + $0xa] sm:$0x1]
  %v1288 = vld [vmem:[%s0 + $0xe] sm:$0x1]
  %v1289 = vpack.c.bf16 %v1285, %v1285
  %v1290 = vpack.c.bf16 %v1286, %v1286
  %v1291 = vpack.c.bf16 %v1287, %v1287
  %v1292 = vpack.c.bf16 %v1288, %v1288
  %s1293 = scalar_lea.vmem %s2, 128
  %v1294 = vld [vmem:[%s1293] sm:$0xf]
  %v1295 = vld [vmem:[%s1293 + $0x4] sm:$0xf]
  %v1296 = vld [vmem:[%s1293 + $0x8] sm:$0xf]
  %v1297 = vld [vmem:[%s1293 + $0xc] sm:$0xf]
  %v1298 = vld [vmem:[%s1293 + $0x10] sm:$0xf]
  %v1299 = vld [vmem:[%s1293 + $0x14] sm:$0xf]
  %v1300 = vld [vmem:[%s1293 + $0x18] sm:$0xf]
  %v1301 = vld [vmem:[%s1293 + $0x1c] sm:$0xf]
  %v1302 = vld [vmem:[%s1293 + $0x20] sm:$0xf]
  %v1303 = vld [vmem:[%s1293 + $0x24] sm:$0xf]
  %v1304 = vld [vmem:[%s1293 + $0x28] sm:$0xf]
  %v1305 = vld [vmem:[%s1293 + $0x2c] sm:$0xf]
  %v1306 = vld [vmem:[%s1293 + $0x30] sm:$0xf]
  %v1307 = vld [vmem:[%s1293 + $0x34] sm:$0xf]
  %v1308 = vld [vmem:[%s1293 + $0x38] sm:$0xf]
  %v1309 = vld [vmem:[%s1293 + $0x3c] sm:$0xf]
  %s1310 = scalar_lea.vmem %s4, 2
  %v1311 = vld [vmem:[%s1310] sm:$0x1]
  %v1313 = vlaneseq
  %v1314 = vshrl.u32 %v1313, 7
  %v1315 = vsub.s32 0, %v1314
  %v1316 = vrot.slane %v1311, %v1315
  %v1322 = vunpack.c.l.b16 %v1289
  %v1323 = vunpack.c.l.b16 %v1290
  %v1324 = vunpack.c.l.b16 %v1291
  %v1325 = vunpack.c.l.b16 %v1292
  %v1326 = vrot.slane %v1323, 7
  %v1327 = vsel %vm314, %v1326, %v1322
  %v1328 = vrot.slane %v1324, 6
  %v1329 = vsel %vm317, %v1328, %v1327
  %v1330 = vrot.slane %v1325, 5
  %v1331 = vsel %vm320, %v1330, %v1329
  %v1332 = vpack.c.b16 %v1331, %v1331
  %v1350 = vunpack.c.l.b16 %v1294
  %v1351 = vunpack.c.l.b16 %v1295
  %v1352 = vunpack.c.l.b16 %v1296
  %v1353 = vunpack.c.l.b16 %v1297
  %v1354 = vunpack.c.l.b16 %v1298
  %v1355 = vunpack.c.l.b16 %v1299
  %v1356 = vunpack.c.l.b16 %v1300
  %v1357 = vunpack.c.l.b16 %v1301
  %v1358 = vunpack.c.l.b16 %v1302
  %v1359 = vunpack.c.l.b16 %v1303
  %v1360 = vunpack.c.l.b16 %v1304
  %v1361 = vunpack.c.l.b16 %v1305
  %v1362 = vunpack.c.l.b16 %v1306
  %v1363 = vunpack.c.l.b16 %v1307
  %v1364 = vunpack.c.l.b16 %v1308
  %v1365 = vunpack.c.l.b16 %v1309
  %v1366 = vpack.c.b16 %v1351, %v1350
  %v1367 = vpack.c.b16 %v1353, %v1352
  %v1368 = vpack.c.b16 %v1355, %v1354
  %v1369 = vpack.c.b16 %v1357, %v1356
  %v1370 = vpack.c.b16 %v1359, %v1358
  %v1371 = vpack.c.b16 %v1361, %v1360
  %v1372 = vpack.c.b16 %v1363, %v1362
  %v1373 = vpack.c.b16 %v1365, %v1364
  %1382 = vmatprep.subr.bf16.mxu0 0
  %1383 = vmatpush1.bf16.msra.mxu0 %v1366
  %1384 = vmatprep.subr.bf16.mxu0 0
  %1385 = vmatpush1.bf16.msra.mxu0 %v1367
  %1386 = vmatprep.subr.bf16.mxu0 0
  %1387 = vmatpush1.bf16.msra.mxu0 %v1368
  %1388 = vmatprep.subr.bf16.mxu0 0
  %1389 = vmatpush1.bf16.msra.mxu0 %v1369
  %1390 = vmatprep.subr.bf16.mxu0 0
  %1391 = vmatpush1.bf16.msra.mxu0 %v1370
  %1392 = vmatprep.subr.bf16.mxu0 0
  %1393 = vmatpush1.bf16.msra.mxu0 %v1371
  %1394 = vmatprep.subr.bf16.mxu0 0
  %1395 = vmatpush1.bf16.msra.mxu0 %v1372
  %1396 = vmatprep.subr.bf16.mxu0 0
  %1397 = vmatpush1.bf16.msra.mxu0 %v1373
  %1398 = vmatprep.subr.bf16.mxu0 0
  %1399 = vmatpush1.bf16.msra.mxu0 0
  %1400 = vmatprep.subr.bf16.mxu0 0
  %1401 = vmatpush1.bf16.msra.mxu0 0
  %1402 = vmatprep.subr.bf16.mxu0 0
  %1403 = vmatpush1.bf16.msra.mxu0 0
  %1404 = vmatprep.subr.bf16.mxu0 0
  %1405 = vmatpush1.bf16.msra.mxu0 0
  %1406 = vmatprep.subr.bf16.mxu0 0
  %1407 = vmatpush1.bf16.msra.mxu0 0
  %1408 = vmatprep.subr.bf16.mxu0 0
  %1409 = vmatpush1.bf16.msra.mxu0 0
  %1410 = vmatprep.subr.bf16.mxu0 0
  %1411 = vmatpush1.bf16.msra.mxu0 0
  %1412 = vmatprep.subr.bf16.mxu0 0
  %1413 = vmatpush1.bf16.msra.mxu0 0
  %1414 = vmatprep.mubr.bf16.mxu0 0
  %1415 = vmatmul.mubr.bf16.gmra.mrb[0].mxu0 %v1332
  %v1416 = vpop.f32.mrb[0].mxu0
  %v1417 = vadd.f32 %v1316, %v1416
  %v1418 = vpop.f32.mrb[0].mxu0
  %v1419 = vpop.f32.mrb[0].mxu0
  %v1420 = vpop.f32.mrb[0].mxu0
  %1421 = vdwg.mxu0
  %1423 = vrot.lane.b32.xlu0 %v1417, 120
  %v1424 = vpop.permute.xlu0 %1423
  %1426 = vrot.lane.b32.xlu0 %v1417, 112
  %v1427 = vpop.permute.xlu0 %1426
  %1429 = vrot.lane.b32.xlu0 %v1417, 104
  %v1430 = vpop.permute.xlu0 %1429
  %1432 = vrot.lane.b32.xlu0 %v1417, 96
  %v1433 = vpop.permute.xlu0 %1432
  %1435 = vrot.lane.b32.xlu0 %v1417, 88
  %v1436 = vpop.permute.xlu0 %1435
  %1438 = vrot.lane.b32.xlu0 %v1417, 80
  %v1439 = vpop.permute.xlu0 %1438
  %1441 = vrot.lane.b32.xlu0 %v1417, 72
  %v1442 = vpop.permute.xlu0 %1441
  %v1444 = vcombine.low %v1417, %v1427
  %v1446 = vunpack.c.l.s4 1983009808
  %v1447 = vunpack.c.0.s8 %v1446
  %v1448 = vlaneseq
  %v1449 = vshrl.u32 %v1448, 7
  %v1450 = vsub.s32 %v1447, %v1449
  %v1451 = vrot.slane %v1444, %v1450
  %v1452 = vcombine.low %v1424, %v1430
  %v1454 = vunpack.c.l.s4 1983009808
  %v1455 = vunpack.c.0.s8 %v1454
  %v1456 = vlaneseq
  %v1457 = vshrl.u32 %v1456, 7
  %v1458 = vsub.s32 %v1455, %v1457
  %v1459 = vrot.slane %v1452, %v1458
  %v1460 = vcombine.low %v1433, %v1439
  %v1462 = vunpack.c.l.s4 1983009808
  %v1463 = vunpack.c.0.s8 %v1462
  %v1464 = vlaneseq
  %v1465 = vshrl.u32 %v1464, 7
  %v1466 = vsub.s32 %v1463, %v1465
  %v1467 = vrot.slane %v1460, %v1466
  %v1468 = vcombine.low %v1436, %v1442
  %v1470 = vunpack.c.l.s4 1983009808
  %v1471 = vunpack.c.0.s8 %v1470
  %v1472 = vlaneseq
  %v1473 = vshrl.u32 %v1472, 7
  %v1474 = vsub.s32 %v1471, %v1473
  %v1475 = vrot.slane %v1468, %v1474
  %v1476 = vcombine.low %v1451, %v1459
  %v1477 = vcombine.high %v1451, %v1459
  %v1479 = vunpack.c.l.s4 1934713408
  %v1480 = vunpack.c.0.s8 %v1479
  %v1481 = vlaneseq
  %v1482 = vshrl.u32 %v1481, 7
  %v1483 = vsub.s32 %v1480, %v1482
  %v1484 = vrot.slane %v1476, %v1483
  %v1486 = vunpack.c.l.s4 1934713408
  %v1487 = vunpack.c.0.s8 %v1486
  %v1488 = vlaneseq
  %v1489 = vshrl.u32 %v1488, 7
  %v1490 = vsub.s32 %v1487, %v1489
  %v1491 = vrot.slane %v1477, %v1490
  %v1492 = vcombine.low %v1467, %v1475
  %v1493 = vcombine.high %v1467, %v1475
  %v1495 = vunpack.c.l.s4 1934713408
  %v1496 = vunpack.c.0.s8 %v1495
  %v1497 = vlaneseq
  %v1498 = vshrl.u32 %v1497, 7
  %v1499 = vsub.s32 %v1496, %v1498
  %v1500 = vrot.slane %v1492, %v1499
  %v1502 = vunpack.c.l.s4 1934713408
  %v1503 = vunpack.c.0.s8 %v1502
  %v1504 = vlaneseq
  %v1505 = vshrl.u32 %v1504, 7
  %v1506 = vsub.s32 %v1503, %v1505
  %v1507 = vrot.slane %v1493, %v1506
  %v1508 = vcombine.low %v1484, %v1500
  %v1509 = vcombine.high %v1484, %v1500
  %v1510 = vcombine.low %v1491, %v1507
  %v1511 = vcombine.high %v1491, %v1507
  %v1512 = vsel %vm224, %v1508, -inf
  %1513 = vmax.xlane.f32.xlu0 %v1512
  %v1514 = vpop.xlane.xlu0 %1513
  %v1515 = vsel %vm224, %v1509, -inf
  %1516 = vmax.xlane.f32.xlu0 %v1515
  %v1517 = vpop.xlane.xlu0 %1516
  %v1518 = vsel %vm224, %v1510, -inf
  %1519 = vmax.xlane.f32.xlu0 %v1518
  %v1520 = vpop.xlane.xlu0 %1519
  %v1521 = vsel %vm224, %v1511, -inf
  %1522 = vmax.xlane.f32.xlu0 %v1521
  %v1523 = vpop.xlane.xlu0 %1522
  %v1524 = vsub.f32 %v1508, %v1514
  %v1525 = vsub.f32 %v1509, %v1517
  %v1526 = vsub.f32 %v1510, %v1520
  %v1527 = vsub.f32 %v1511, %v1523
  %v1528 = vmul.f32 %v1524, 1.442695
  %v1529 = vpow.pop %v1528
  %v1530 = vmul.f32 %v1525, 1.442695
  %v1531 = vpow.pop %v1530
  %v1532 = vmul.f32 %v1526, 1.442695
  %v1533 = vpow.pop %v1532
  %v1534 = vmul.f32 %v1527, 1.442695
  %v1535 = vpow.pop %v1534
  %v1536 = vsel %vm224, %v1529, 0.0
  %1537 = vadd.xlane.f32.xlu0 %v1536
  %v1538 = vpop.xlane.xlu0 %1537
  %v1539 = vsel %vm224, %v1531, 0.0
  %1540 = vadd.xlane.f32.xlu0 %v1539
  %v1541 = vpop.xlane.xlu0 %1540
  %v1542 = vsel %vm224, %v1533, 0.0
  %1543 = vadd.xlane.f32.xlu0 %v1542
  %v1544 = vpop.xlane.xlu0 %1543
  %v1545 = vsel %vm224, %v1535, 0.0
  %1546 = vadd.xlane.f32.xlu0 %v1545
  %v1547 = vpop.xlane.xlu0 %1546
  %v1548 = vrcp.pop %v1538
  %v1549 = vrcp.pop %v1541
  %v1550 = vrcp.pop %v1544
  %v1551 = vrcp.pop %v1547
  %v1552 = vmul.f32 %v1529, %v1548
  %v1553 = vmul.f32 %v1531, %v1549
  %v1554 = vmul.f32 %v1533, %v1550
  %v1555 = vmul.f32 %v1535, %v1551
  %s1556 = scalar_lea.vmem %s3, 64
  %v1557 = vld [vmem:[%s1556] sm:$0xf]
  %v1558 = vld [vmem:[%s1556 + $0x4] sm:$0xf]
  %v1559 = vld [vmem:[%s1556 + $0x8] sm:$0xf]
  %v1560 = vld [vmem:[%s1556 + $0xc] sm:$0xf]
  %v1561 = vld [vmem:[%s1556 + $0x10] sm:$0xf]
  %v1562 = vld [vmem:[%s1556 + $0x14] sm:$0xf]
  %v1563 = vld [vmem:[%s1556 + $0x18] sm:$0xf]
  %v1564 = vld [vmem:[%s1556 + $0x1c] sm:$0xf]
  %v1565 = vunpack.c.l.bf16 %v1557
  %v1566 = vunpack.c.l.bf16 %v1558
  %v1567 = vunpack.c.l.bf16 %v1559
  %v1568 = vunpack.c.l.bf16 %v1560
  %v1569 = vunpack.c.l.bf16 %v1561
  %v1570 = vunpack.c.l.bf16 %v1562
  %v1571 = vunpack.c.l.bf16 %v1563
  %v1572 = vunpack.c.l.bf16 %v1564
  %1574 = vset.pattern.permute.xlu0 0
  %1575 = vperm.xlu0 %1574, %v1552
  %v1576 = vpop.permute.xlu0 %1575
  %1579 = vset.pattern.permute.xlu0 0
  %1580 = vperm.xlu0 %1579, %v1553
  %v1581 = vpop.permute.xlu0 %1580
  %1584 = vset.pattern.permute.xlu0 0
  %1585 = vperm.xlu0 %1584, %v1554
  %v1586 = vpop.permute.xlu0 %1585
  %1589 = vset.pattern.permute.xlu0 0
  %1590 = vperm.xlu0 %1589, %v1555
  %v1591 = vpop.permute.xlu0 %1590
  %v1601 = vrot.slane %v1566, 7
  %v1602 = vsel %vm314, %v1601, %v1565
  %v1603 = vrot.slane %v1567, 6
  %v1604 = vsel %vm317, %v1603, %v1602
  %v1605 = vrot.slane %v1568, 5
  %v1606 = vsel %vm320, %v1605, %v1604
  %v1607 = vrot.slane %v1569, 4
  %v1608 = vsel %vm323, %v1607, %v1606
  %v1609 = vrot.slane %v1570, 3
  %v1610 = vsel %vm326, %v1609, %v1608
  %v1611 = vrot.slane %v1571, 2
  %v1612 = vsel %vm329, %v1611, %v1610
  %v1613 = vrot.slane %v1572, 1
  %v1614 = vsel %vm332, %v1613, %v1612
  %v1616 = vmul.f32 %v1576, %v1614
  %v1617 = vmul.f32 %v1581, %v1614
  %v1618 = vmul.f32 %v1586, %v1614
  %v1619 = vmul.f32 %v1591, %v1614
  %v1620 = vadd.f32 %v1616, 0.0
  %v1621 = vadd.f32 %v1617, 0.0
  %v1622 = vadd.f32 %v1618, 0.0
  %v1623 = vadd.f32 %v1619, 0.0
  %1624 = vset.pattern.permute.xlu0 1
  %1625 = vperm.xlu0 %1624, %v1552
  %v1626 = vpop.permute.xlu0 %1625
  %1628 = vset.pattern.permute.xlu0 1
  %1629 = vperm.xlu0 %1628, %v1553
  %v1630 = vpop.permute.xlu0 %1629
  %1632 = vset.pattern.permute.xlu0 1
  %1633 = vperm.xlu0 %1632, %v1554
  %v1634 = vpop.permute.xlu0 %1633
  %1636 = vset.pattern.permute.xlu0 1
  %1637 = vperm.xlu0 %1636, %v1555
  %v1638 = vpop.permute.xlu0 %1637
  %v1640 = vrot.slane %v1565, 1
  %v1641 = vsel %vm314, %v1566, %v1640
  %v1642 = vrot.slane %v1567, 7
  %v1643 = vsel %vm317, %v1642, %v1641
  %v1644 = vrot.slane %v1568, 6
  %v1645 = vsel %vm320, %v1644, %v1643
  %v1646 = vrot.slane %v1569, 5
  %v1647 = vsel %vm323, %v1646, %v1645
  %v1648 = vrot.slane %v1570, 4
  %v1649 = vsel %vm326, %v1648, %v1647
  %v1650 = vrot.slane %v1571, 3
  %v1651 = vsel %vm329, %v1650, %v1649
  %v1652 = vrot.slane %v1572, 2
  %v1653 = vsel %vm332, %v1652, %v1651
  %v1655 = vmul.f32 %v1626, %v1653
  %v1656 = vmul.f32 %v1630, %v1653
  %v1657 = vmul.f32 %v1634, %v1653
  %v1658 = vmul.f32 %v1638, %v1653
  %v1659 = vadd.f32 %v1620, %v1655
  %v1660 = vadd.f32 %v1621, %v1656
  %v1661 = vadd.f32 %v1622, %v1657
  %v1662 = vadd.f32 %v1623, %v1658
  %1663 = vset.pattern.permute.xlu0 2
  %1664 = vperm.xlu0 %1663, %v1552
  %v1665 = vpop.permute.xlu0 %1664
  %1667 = vset.pattern.permute.xlu0 2
  %1668 = vperm.xlu0 %1667, %v1553
  %v1669 = vpop.permute.xlu0 %1668
  %1671 = vset.pattern.permute.xlu0 2
  %1672 = vperm.xlu0 %1671, %v1554
  %v1673 = vpop.permute.xlu0 %1672
  %1675 = vset.pattern.permute.xlu0 2
  %1676 = vperm.xlu0 %1675, %v1555
  %v1677 = vpop.permute.xlu0 %1676
  %v1679 = vrot.slane %v1565, 2
  %v1680 = vrot.slane %v1566, 1
  %v1681 = vsel %vm314, %v1680, %v1679
  %v1682 = vsel %vm317, %v1567, %v1681
  %v1683 = vrot.slane %v1568, 7
  %v1684 = vsel %vm320, %v1683, %v1682
  %v1685 = vrot.slane %v1569, 6
  %v1686 = vsel %vm323, %v1685, %v1684
  %v1687 = vrot.slane %v1570, 5
  %v1688 = vsel %vm326, %v1687, %v1686
  %v1689 = vrot.slane %v1571, 4
  %v1690 = vsel %vm329, %v1689, %v1688
  %v1691 = vrot.slane %v1572, 3
  %v1692 = vsel %vm332, %v1691, %v1690
  %v1694 = vmul.f32 %v1665, %v1692
  %v1695 = vmul.f32 %v1669, %v1692
  %v1696 = vmul.f32 %v1673, %v1692
  %v1697 = vmul.f32 %v1677, %v1692
  %v1698 = vadd.f32 %v1659, %v1694
  %v1699 = vadd.f32 %v1660, %v1695
  %v1700 = vadd.f32 %v1661, %v1696
  %v1701 = vadd.f32 %v1662, %v1697
  %1702 = vset.pattern.permute.xlu0 3
  %1703 = vperm.xlu0 %1702, %v1552
  %v1704 = vpop.permute.xlu0 %1703
  %1706 = vset.pattern.permute.xlu0 3
  %1707 = vperm.xlu0 %1706, %v1553
  %v1708 = vpop.permute.xlu0 %1707
  %1710 = vset.pattern.permute.xlu0 3
  %1711 = vperm.xlu0 %1710, %v1554
  %v1712 = vpop.permute.xlu0 %1711
  %1714 = vset.pattern.permute.xlu0 3
  %1715 = vperm.xlu0 %1714, %v1555
  %v1716 = vpop.permute.xlu0 %1715
  %v1718 = vrot.slane %v1565, 3
  %v1719 = vrot.slane %v1566, 2
  %v1720 = vsel %vm314, %v1719, %v1718
  %v1721 = vrot.slane %v1567, 1
  %v1722 = vsel %vm317, %v1721, %v1720
  %v1723 = vsel %vm320, %v1568, %v1722
  %v1724 = vrot.slane %v1569, 7
  %v1725 = vsel %vm323, %v1724, %v1723
  %v1726 = vrot.slane %v1570, 6
  %v1727 = vsel %vm326, %v1726, %v1725
  %v1728 = vrot.slane %v1571, 5
  %v1729 = vsel %vm329, %v1728, %v1727
  %v1730 = vrot.slane %v1572, 4
  %v1731 = vsel %vm332, %v1730, %v1729
  %v1733 = vmul.f32 %v1704, %v1731
  %v1734 = vmul.f32 %v1708, %v1731
  %v1735 = vmul.f32 %v1712, %v1731
  %v1736 = vmul.f32 %v1716, %v1731
  %v1737 = vadd.f32 %v1698, %v1733
  %v1738 = vadd.f32 %v1699, %v1734
  %v1739 = vadd.f32 %v1700, %v1735
  %v1740 = vadd.f32 %v1701, %v1736
  %1741 = vset.pattern.permute.xlu0 4
  %1742 = vperm.xlu0 %1741, %v1552
  %v1743 = vpop.permute.xlu0 %1742
  %1745 = vset.pattern.permute.xlu0 4
  %1746 = vperm.xlu0 %1745, %v1553
  %v1747 = vpop.permute.xlu0 %1746
  %1749 = vset.pattern.permute.xlu0 4
  %1750 = vperm.xlu0 %1749, %v1554
  %v1751 = vpop.permute.xlu0 %1750
  %1753 = vset.pattern.permute.xlu0 4
  %1754 = vperm.xlu0 %1753, %v1555
  %v1755 = vpop.permute.xlu0 %1754
  %v1757 = vrot.slane %v1565, 4
  %v1758 = vrot.slane %v1566, 3
  %v1759 = vsel %vm314, %v1758, %v1757
  %v1760 = vrot.slane %v1567, 2
  %v1761 = vsel %vm317, %v1760, %v1759
  %v1762 = vrot.slane %v1568, 1
  %v1763 = vsel %vm320, %v1762, %v1761
  %v1764 = vsel %vm323, %v1569, %v1763
  %v1765 = vrot.slane %v1570, 7
  %v1766 = vsel %vm326, %v1765, %v1764
  %v1767 = vrot.slane %v1571, 6
  %v1768 = vsel %vm329, %v1767, %v1766
  %v1769 = vrot.slane %v1572, 5
  %v1770 = vsel %vm332, %v1769, %v1768
  %v1772 = vmul.f32 %v1743, %v1770
  %v1773 = vmul.f32 %v1747, %v1770
  %v1774 = vmul.f32 %v1751, %v1770
  %v1775 = vmul.f32 %v1755, %v1770
  %v1776 = vadd.f32 %v1737, %v1772
  %v1777 = vadd.f32 %v1738, %v1773
  %v1778 = vadd.f32 %v1739, %v1774
  %v1779 = vadd.f32 %v1740, %v1775
  %1780 = vset.pattern.permute.xlu0 5
  %1781 = vperm.xlu0 %1780, %v1552
  %v1782 = vpop.permute.xlu0 %1781
  %1784 = vset.pattern.permute.xlu0 5
  %1785 = vperm.xlu0 %1784, %v1553
  %v1786 = vpop.permute.xlu0 %1785
  %1788 = vset.pattern.permute.xlu0 5
  %1789 = vperm.xlu0 %1788, %v1554
  %v1790 = vpop.permute.xlu0 %1789
  %1792 = vset.pattern.permute.xlu0 5
  %1793 = vperm.xlu0 %1792, %v1555
  %v1794 = vpop.permute.xlu0 %1793
  %v1796 = vrot.slane %v1565, 5
  %v1797 = vrot.slane %v1566, 4
  %v1798 = vsel %vm314, %v1797, %v1796
  %v1799 = vrot.slane %v1567, 3
  %v1800 = vsel %vm317, %v1799, %v1798
  %v1801 = vrot.slane %v1568, 2
  %v1802 = vsel %vm320, %v1801, %v1800
  %v1803 = vrot.slane %v1569, 1
  %v1804 = vsel %vm323, %v1803, %v1802
  %v1805 = vsel %vm326, %v1570, %v1804
  %v1806 = vrot.slane %v1571, 7
  %v1807 = vsel %vm329, %v1806, %v1805
  %v1808 = vrot.slane %v1572, 6
  %v1809 = vsel %vm332, %v1808, %v1807
  %v1811 = vmul.f32 %v1782, %v1809
  %v1812 = vmul.f32 %v1786, %v1809
  %v1813 = vmul.f32 %v1790, %v1809
  %v1814 = vmul.f32 %v1794, %v1809
  %v1815 = vadd.f32 %v1776, %v1811
  %v1816 = vadd.f32 %v1777, %v1812
  %v1817 = vadd.f32 %v1778, %v1813
  %v1818 = vadd.f32 %v1779, %v1814
  %1819 = vset.pattern.permute.xlu0 6
  %1820 = vperm.xlu0 %1819, %v1552
  %v1821 = vpop.permute.xlu0 %1820
  %1823 = vset.pattern.permute.xlu0 6
  %1824 = vperm.xlu0 %1823, %v1553
  %v1825 = vpop.permute.xlu0 %1824
  %1827 = vset.pattern.permute.xlu0 6
  %1828 = vperm.xlu0 %1827, %v1554
  %v1829 = vpop.permute.xlu0 %1828
  %1831 = vset.pattern.permute.xlu0 6
  %1832 = vperm.xlu0 %1831, %v1555
  %v1833 = vpop.permute.xlu0 %1832
  %v1835 = vrot.slane %v1565, 6
  %v1836 = vrot.slane %v1566, 5
  %v1837 = vsel %vm314, %v1836, %v1835
  %v1838 = vrot.slane %v1567, 4
  %v1839 = vsel %vm317, %v1838, %v1837
  %v1840 = vrot.slane %v1568, 3
  %v1841 = vsel %vm320, %v1840, %v1839
  %v1842 = vrot.slane %v1569, 2
  %v1843 = vsel %vm323, %v1842, %v1841
  %v1844 = vrot.slane %v1570, 1
  %v1845 = vsel %vm326, %v1844, %v1843
  %v1846 = vsel %vm329, %v1571, %v1845
  %v1847 = vrot.slane %v1572, 7
  %v1848 = vsel %vm332, %v1847, %v1846
  %v1850 = vmul.f32 %v1821, %v1848
  %v1851 = vmul.f32 %v1825, %v1848
  %v1852 = vmul.f32 %v1829, %v1848
  %v1853 = vmul.f32 %v1833, %v1848
  %v1854 = vadd.f32 %v1815, %v1850
  %v1855 = vadd.f32 %v1816, %v1851
  %v1856 = vadd.f32 %v1817, %v1852
  %v1857 = vadd.f32 %v1818, %v1853
  %1858 = vset.pattern.permute.xlu0 7
  %1859 = vperm.xlu0 %1858, %v1552
  %v1860 = vpop.permute.xlu0 %1859
  %1862 = vset.pattern.permute.xlu0 7
  %1863 = vperm.xlu0 %1862, %v1553
  %v1864 = vpop.permute.xlu0 %1863
  %1866 = vset.pattern.permute.xlu0 7
  %1867 = vperm.xlu0 %1866, %v1554
  %v1868 = vpop.permute.xlu0 %1867
  %1870 = vset.pattern.permute.xlu0 7
  %1871 = vperm.xlu0 %1870, %v1555
  %v1872 = vpop.permute.xlu0 %1871
  %v1874 = vrot.slane %v1565, 7
  %v1875 = vrot.slane %v1566, 6
  %v1876 = vsel %vm314, %v1875, %v1874
  %v1877 = vrot.slane %v1567, 5
  %v1878 = vsel %vm317, %v1877, %v1876
  %v1879 = vrot.slane %v1568, 4
  %v1880 = vsel %vm320, %v1879, %v1878
  %v1881 = vrot.slane %v1569, 3
  %v1882 = vsel %vm323, %v1881, %v1880
  %v1883 = vrot.slane %v1570, 2
  %v1884 = vsel %vm326, %v1883, %v1882
  %v1885 = vrot.slane %v1571, 1
  %v1886 = vsel %vm329, %v1885, %v1884
  %v1887 = vsel %vm332, %v1572, %v1886
  %v1889 = vmul.f32 %v1860, %v1887
  %v1890 = vmul.f32 %v1864, %v1887
  %v1891 = vmul.f32 %v1868, %v1887
  %v1892 = vmul.f32 %v1872, %v1887
  %v1893 = vadd.f32 %v1854, %v1889
  %v1894 = vadd.f32 %v1855, %v1890
  %v1895 = vadd.f32 %v1856, %v1891
  %v1896 = vadd.f32 %v1857, %v1892
  %v1897 = vmul.f32 %v1893, %v1893
  %v1898 = vmul.f32 %v1894, %v1894
  %v1899 = vmul.f32 %v1895, %v1895
  %v1900 = vmul.f32 %v1896, %v1896
  %1901 = vadd.xlane.f32.xlu0 %v1897
  %v1902 = vpop.xlane.xlu0 %1901
  %1903 = vadd.xlane.f32.xlu0 %v1898
  %v1904 = vpop.xlane.xlu0 %1903
  %1905 = vadd.xlane.f32.xlu0 %v1899
  %v1906 = vpop.xlane.xlu0 %1905
  %1907 = vadd.xlane.f32.xlu0 %v1900
  %v1908 = vpop.xlane.xlu0 %1907
  %v1909 = vadd.f32 %v1902, 1e-12
  %v1910 = vadd.f32 %v1904, 1e-12
  %v1911 = vadd.f32 %v1906, 1e-12
  %v1912 = vadd.f32 %v1908, 1e-12
  %v1913 = vrsqrt.pop %v1909
  %v1914 = vrsqrt.pop %v1910
  %v1915 = vrsqrt.pop %v1911
  %v1916 = vrsqrt.pop %v1912
  %v1917 = vmul.f32 %v1893, %v1913
  %v1918 = vmul.f32 %v1894, %v1914
  %v1919 = vmul.f32 %v1895, %v1915
  %v1920 = vmul.f32 %v1896, %v1916
  %s1921 = scalar_lea.vmem %s5, 64
  %1922 = vst [vmem:[%s1921] sm:$0xff] %v1917
  %1923 = vst [vmem:[%s1921 + $0x8] sm:$0xff] %v1918
  %1924 = vst [vmem:[%s1921 + $0x10] sm:$0xff] %v1919
  %1925 = vst [vmem:[%s1921 + $0x18] sm:$0xff] %v1920
  // Predicated region
  $region22: #{text_encoder_forward.1} parent=0 // pred_check
    _
  $region23: #{text_encoder_forward.1} parent=0 // pred_check_branch
    %1927 = sbr.rel (0) target = $region25
  $region24: #{text_encoder_forward.1} parent=0 // pred_region
    _
  $region25: #{text_encoder_forward.1} parent=0 // pred_fallthru
    _
  // Predicated region
  $region26: #{text_encoder_forward.1} parent=0 // pred_check
    _
  $region27: #{text_encoder_forward.1} parent=0 // pred_check_branch
    %1929 = sbr.rel (0) target = $region29
  $region28: #{text_encoder_forward.1} parent=0 // pred_region
    _
  $region29: #{text_encoder_forward.1} parent=0 // pred_fallthru
    _

</llo_original>
